<compile_context>
chip_gen: v7x
topology: tpu7x:2x2x1
jax: 0.10.0
libtpu: 0.0.40
codegen_flags: <defaults>
</compile_context>

<pallas_src>
import functools

import jax
import jax.numpy as jnp
from jax.experimental import pallas as pl
from jax.experimental.pallas import tpu as pltpu


def _round_up(x, m):
    return (x + m - 1) // m * m


def _unroll(n_steps, cap=8):
    # Full unroll only pays for scheduler visibility; unbounded unroll at large
    # trip counts blows instruction memory / vreg live ranges (forces spills).
    return True if n_steps <= 32 else cap


def _make_rnn_kernel(S, Bp, bf16_input_proj=False):
    def kernel(ids_ref, emb_ref, wih_ref, whh_ref, brnn_ref, wfc_ref, bfc_ref,
               out_ref, x_ref, xp_ref):
        Hp = whh_ref.shape[0]

        # ---- 1) In-kernel embedding gather (token ids live in SMEM). ----
        # One lane/sublane-dense (Bp, Ep) store per timestep; per-row dynamic
        # sublane reads from the VMEM embedding table.
        def gather_t(t, carry):
            base = pl.multiple_of(t * Bp, 8)
            rows = [emb_ref[pl.ds(ids_ref[t * Bp + b], 1), :] for b in range(Bp)]
            x_ref[pl.ds(base, Bp), :] = jnp.concatenate(rows, axis=0)
            return carry

        jax.lax.fori_loop(0, S, gather_t, 0, unroll=_unroll(S))

        # ---- 2) Input projection for ALL timesteps as one dense MXU matmul,
        #         with the folded RNN bias added once (hoisted out of the loop).
        x_all = x_ref[...]
        wih = wih_ref[...]
        if bf16_input_proj:
            # v6e/v7x MXU runs at native rate only for bf16; accumulate in f32.
            x_all = x_all.astype(jnp.bfloat16)
            wih = wih.astype(jnp.bfloat16)
        xp_ref[...] = (
            jnp.dot(x_all, wih, preferred_element_type=jnp.float32) + brnn_ref[...]
        )

        # ---- 3) Serial recurrence: one matmul on the critical path per step. ----
        whh = whh_ref[...]  # recurrent weight read once, reused every step

        def step(t, h):
            base = pl.multiple_of(t * Bp, 8)
            xp_t = xp_ref[pl.ds(base, Bp), :]
            return jnp.tanh(
                xp_t + jnp.dot(h, whh, preferred_element_type=jnp.float32)
            )

        h_final = jax.lax.fori_loop(
            0, S, step, jnp.zeros((Bp, Hp), jnp.float32), unroll=_unroll(S)
        )

        # ---- 4) Final FC on the last hidden state (lane-dense output store). ----
        out_ref[...] = (
            jnp.dot(h_final, wfc_ref[...], preferred_element_type=jnp.float32)
            + bfc_ref[...]
        ).astype(out_ref.dtype)

    return kernel


def prepare_params(emb_table, w_ih, w_hh, b_ih, b_hh, w_fc, b_fc):
    """Parameter-only transforms (transpose / pad / bias fold), done ONCE and cached."""
    V, E = emb_table.shape
    H = w_hh.shape[0]
    O = w_fc.shape[0]
    Vp = _round_up(V, 8)
    Ep = _round_up(E, 128)
    Hp = _round_up(H, 128)
    Op = _round_up(O, 128)
    f32 = jnp.float32
    return {
        "emb":   jnp.pad(emb_table.astype(f32), ((0, Vp - V), (0, Ep - E))),   # (Vp, Ep)
        "wih_t": jnp.pad(w_ih.T.astype(f32), ((0, Ep - E), (0, Hp - H))),      # (Ep, Hp)
        "whh_t": jnp.pad(w_hh.T.astype(f32), ((0, Hp - H), (0, Hp - H))),      # (Hp, Hp)
        "b_rnn": jnp.pad((b_ih + b_hh).astype(f32), (0, Hp - H))[None, :],     # (1, Hp)
        "wfc_t": jnp.pad(w_fc.T.astype(f32), ((0, Hp - H), (0, Op - O))),      # (Hp, Op)
        "b_fc":  jnp.pad(b_fc.astype(f32), (0, Op - O))[None, :],              # (1, Op)
    }


@functools.partial(jax.jit, static_argnames=("output_dim", "bf16_input_proj"))
def rnn_forward(text, params, output_dim, bf16_input_proj=False):
    """text: (S, B) int32 token ids. Returns (B, output_dim) float32."""
    S, B = text.shape
    emb, wih_t, whh_t = params["emb"], params["wih_t"], params["whh_t"]
    b_rnn, wfc_t, b_fc = params["b_rnn"], params["wfc_t"], params["b_fc"]
    Ep = emb.shape[1]
    Hp = whh_t.shape[0]
    Op = wfc_t.shape[1]
    Bp = _round_up(B, 8)

    # Token ids padded to a full sublane tile per timestep. Pad value 0 is a
    # valid token id; padded batch rows are row-independent and sliced off below.
    ids = jnp.pad(text.astype(jnp.int32), ((0, 0), (0, Bp - B))).reshape(S * Bp)

    # Explicit VMEM budget from actual residency (inputs + output + scratch),
    # clamped so the configuration stays v7x-safe (64 MiB per TensorCore).
    resident_bytes = 4 * (
        emb.size + wih_t.size + whh_t.size + b_rnn.size + wfc_t.size + b_fc.size
        + Bp * Op + S * Bp * Ep + S * Bp * Hp
    )
    vmem_limit = int(min(max(4 * resident_bytes, 32 * 1024 * 1024),
                         48 * 1024 * 1024))

    vmem = pl.BlockSpec(memory_space=pltpu.MemorySpace.VMEM)
    smem = pl.BlockSpec(memory_space=pltpu.MemorySpace.SMEM)

    out = pl.pallas_call(
        _make_rnn_kernel(S, Bp, bf16_input_proj),
        out_shape=jax.ShapeDtypeStruct((Bp, Op), jnp.float32),
        in_specs=[smem, vmem, vmem, vmem, vmem, vmem, vmem],
        out_specs=vmem,
        scratch_shapes=[
            pltpu.VMEM((S * Bp, Ep), jnp.float32),  # gathered embeddings (flat)
            pltpu.VMEM((S * Bp, Hp), jnp.float32),  # precomputed input projections
        ],
        compiler_params=pltpu.CompilerParams(vmem_limit_bytes=vmem_limit),
    )(ids, emb, wih_t, whh_t, b_rnn, wfc_t, b_fc)
    return out[:B, :output_dim]


def rnn_reference(text, emb_table, w_ih, w_hh, b_ih, b_hh, w_fc, b_fc):
    """Pure-JAX reference matching torch.nn.RNN semantics (h0 = 0, tanh)."""
    embedded = jnp.take(emb_table, text, axis=0)  # (S, B, E)
    B = text.shape[1]
    H = w_hh.shape[0]

    def step(h, x_t):
        h_new = jnp.tanh(x_t @ w_ih.T + b_ih + h @ w_hh.T + b_hh)
        return h_new, h_new

    h0 = jnp.zeros((B, H), jnp.float32)
    h_final, _ = jax.lax.scan(step, h0, embedded)
    return h_final @ w_fc.T + b_fc


if __name__ == "__main__":
    # Small shapes consistent with the module's forward.
    input_dim = 50       # vocab size
    embedding_dim = 32
    hidden_dim = 32
    output_dim = 8
    seq_len = 8
    batch = 2

    key = jax.random.PRNGKey(0)
    keys = jax.random.split(key, 8)

    emb_table = jax.random.normal(keys[0], (input_dim, embedding_dim), jnp.float32)
    bound = 1.0 / jnp.sqrt(jnp.float32(hidden_dim))
    w_ih = jax.random.uniform(keys[1], (hidden_dim, embedding_dim), jnp.float32, -bound, bound)
    w_hh = jax.random.uniform(keys[2], (hidden_dim, hidden_dim), jnp.float32, -bound, bound)
    b_ih = jax.random.uniform(keys[3], (hidden_dim,), jnp.float32, -bound, bound)
    b_hh = jax.random.uniform(keys[4], (hidden_dim,), jnp.float32, -bound, bound)
    w_fc = jax.random.uniform(keys[5], (output_dim, hidden_dim), jnp.float32, -bound, bound)
    b_fc = jax.random.uniform(keys[6], (output_dim,), jnp.float32, -bound, bound)

    # Token ids: (seq_len, batch), int32 (nn.RNN default batch_first=False).
    text = jax.random.randint(keys[7], (seq_len, batch), 0, input_dim, dtype=jnp.int32)

    # Parameter-only prep, cached outside the per-call hot path.
    params = prepare_params(emb_table, w_ih, w_hh, b_ih, b_hh, w_fc, b_fc)
    params = jax.tree_util.tree_map(jax.block_until_ready, params)

    out = rnn_forward(text, params, output_dim)
    out = jax.block_until_ready(out)

    ref = rnn_reference(text, emb_table, w_ih, w_hh, b_ih, b_hh, w_fc, b_fc)
    assert out.shape == (batch, output_dim)
    assert jnp.allclose(out, ref, atol=2e-5, rtol=2e-5), (out, ref)

    print("KERNEL_OK")
</pallas_src>

<mosaic_0001>
module attributes {stable_mosaic.version = 11 : i64} {
  func.func @kernel(%arg0: memref<64xi32, #tpu.memory_space<smem>>, %arg1: memref<56x128xf32, #tpu.memory_space<vmem>>, %arg2: memref<128x128xf32, #tpu.memory_space<vmem>>, %arg3: memref<128x128xf32, #tpu.memory_space<vmem>>, %arg4: memref<1x128xf32, #tpu.memory_space<vmem>>, %arg5: memref<128x128xf32, #tpu.memory_space<vmem>>, %arg6: memref<1x128xf32, #tpu.memory_space<vmem>>, %arg7: memref<8x128xf32, #tpu.memory_space<vmem>>, %arg8: memref<64x128xf32, #tpu.memory_space<vmem>>, %arg9: memref<64x128xf32, #tpu.memory_space<vmem>>) attributes {dimension_semantics = [], scalar_prefetch = 0 : i64, scratch_operands = 2 : i64, tpu.core_type = #tpu.core_type<tc>} {
    %c0_i32 = arith.constant 0 : i32
    %c8_i32 = arith.constant 8 : i32
    %0 = arith.muli %c0_i32, %c8_i32 : i32
    %1 = tpu.assume_multiple %0, 8 : i32
    %c8_i32_0 = arith.constant 8 : i32
    %2 = arith.muli %c0_i32, %c8_i32_0 : i32
    %c0_i32_1 = arith.constant 0 : i32
    %3 = arith.addi %2, %c0_i32_1 : i32
    %4 = arith.index_cast %3 : i32 to index
    %5 = memref.load %arg0[%4] : memref<64xi32, #tpu.memory_space<smem>>
    %6 = arith.index_cast %5 : i32 to index
    %c0 = arith.constant 0 : index
    %7 = vector.load %arg1[%6, %c0] : memref<56x128xf32, #tpu.memory_space<vmem>>, vector<1x128xf32>
    %c8_i32_2 = arith.constant 8 : i32
    %8 = arith.muli %c0_i32, %c8_i32_2 : i32
    %c1_i32 = arith.constant 1 : i32
    %9 = arith.addi %8, %c1_i32 : i32
    %10 = arith.index_cast %9 : i32 to index
    %11 = memref.load %arg0[%10] : memref<64xi32, #tpu.memory_space<smem>>
    %12 = arith.index_cast %11 : i32 to index
    %c0_3 = arith.constant 0 : index
    %13 = vector.load %arg1[%12, %c0_3] : memref<56x128xf32, #tpu.memory_space<vmem>>, vector<1x128xf32>
    %c8_i32_4 = arith.constant 8 : i32
    %14 = arith.muli %c0_i32, %c8_i32_4 : i32
    %c2_i32 = arith.constant 2 : i32
    %15 = arith.addi %14, %c2_i32 : i32
    %16 = arith.index_cast %15 : i32 to index
    %17 = memref.load %arg0[%16] : memref<64xi32, #tpu.memory_space<smem>>
    %18 = arith.index_cast %17 : i32 to index
    %c0_5 = arith.constant 0 : index
    %19 = vector.load %arg1[%18, %c0_5] : memref<56x128xf32, #tpu.memory_space<vmem>>, vector<1x128xf32>
    %c8_i32_6 = arith.constant 8 : i32
    %20 = arith.muli %c0_i32, %c8_i32_6 : i32
    %c3_i32 = arith.constant 3 : i32
    %21 = arith.addi %20, %c3_i32 : i32
    %22 = arith.index_cast %21 : i32 to index
    %23 = memref.load %arg0[%22] : memref<64xi32, #tpu.memory_space<smem>>
    %24 = arith.index_cast %23 : i32 to index
    %c0_7 = arith.constant 0 : index
    %25 = vector.load %arg1[%24, %c0_7] : memref<56x128xf32, #tpu.memory_space<vmem>>, vector<1x128xf32>
    %c8_i32_8 = arith.constant 8 : i32
    %26 = arith.muli %c0_i32, %c8_i32_8 : i32
    %c4_i32 = arith.constant 4 : i32
    %27 = arith.addi %26, %c4_i32 : i32
    %28 = arith.index_cast %27 : i32 to index
    %29 = memref.load %arg0[%28] : memref<64xi32, #tpu.memory_space<smem>>
    %30 = arith.index_cast %29 : i32 to index
    %c0_9 = arith.constant 0 : index
    %31 = vector.load %arg1[%30, %c0_9] : memref<56x128xf32, #tpu.memory_space<vmem>>, vector<1x128xf32>
    %c8_i32_10 = arith.constant 8 : i32
    %32 = arith.muli %c0_i32, %c8_i32_10 : i32
    %c5_i32 = arith.constant 5 : i32
    %33 = arith.addi %32, %c5_i32 : i32
    %34 = arith.index_cast %33 : i32 to index
    %35 = memref.load %arg0[%34] : memref<64xi32, #tpu.memory_space<smem>>
    %36 = arith.index_cast %35 : i32 to index
    %c0_11 = arith.constant 0 : index
    %37 = vector.load %arg1[%36, %c0_11] : memref<56x128xf32, #tpu.memory_space<vmem>>, vector<1x128xf32>
    %c8_i32_12 = arith.constant 8 : i32
    %38 = arith.muli %c0_i32, %c8_i32_12 : i32
    %c6_i32 = arith.constant 6 : i32
    %39 = arith.addi %38, %c6_i32 : i32
    %40 = arith.index_cast %39 : i32 to index
    %41 = memref.load %arg0[%40] : memref<64xi32, #tpu.memory_space<smem>>
    %42 = arith.index_cast %41 : i32 to index
    %c0_13 = arith.constant 0 : index
    %43 = vector.load %arg1[%42, %c0_13] : memref<56x128xf32, #tpu.memory_space<vmem>>, vector<1x128xf32>
    %c8_i32_14 = arith.constant 8 : i32
    %44 = arith.muli %c0_i32, %c8_i32_14 : i32
    %c7_i32 = arith.constant 7 : i32
    %45 = arith.addi %44, %c7_i32 : i32
    %46 = arith.index_cast %45 : i32 to index
    %47 = memref.load %arg0[%46] : memref<64xi32, #tpu.memory_space<smem>>
    %48 = arith.index_cast %47 : i32 to index
    %c0_15 = arith.constant 0 : index
    %49 = vector.load %arg1[%48, %c0_15] : memref<56x128xf32, #tpu.memory_space<vmem>>, vector<1x128xf32>
    %50 = tpu.concatenate %7, %13, %19, %25, %31, %37, %43, %49 in 0 : vector<1x128xf32>, vector<1x128xf32>, vector<1x128xf32>, vector<1x128xf32>, vector<1x128xf32>, vector<1x128xf32>, vector<1x128xf32>, vector<1x128xf32> -> vector<8x128xf32>
    %51 = arith.index_cast %1 : i32 to index
    %c0_16 = arith.constant 0 : index
    %52 = vector.load %arg8[%51, %c0_16] : memref<64x128xf32, #tpu.memory_space<vmem>>, vector<8x128xf32>
    tpu.vector_store %arg8[%51, %c0_16], %50 {strides = array<i32>} : memref<64x128xf32, #tpu.memory_space<vmem>>, vector<8x128xf32>,
    %c1_i32_17 = arith.constant 1 : i32
    %c8_i32_18 = arith.constant 8 : i32
    %53 = arith.muli %c1_i32_17, %c8_i32_18 : i32
    %54 = tpu.assume_multiple %53, 8 : i32
    %c8_i32_19 = arith.constant 8 : i32
    %55 = arith.muli %c1_i32_17, %c8_i32_19 : i32
    %c0_i32_20 = arith.constant 0 : i32
    %56 = arith.addi %55, %c0_i32_20 : i32
    %57 = arith.index_cast %56 : i32 to index
    %58 = memref.load %arg0[%57] : memref<64xi32, #tpu.memory_space<smem>>
    %59 = arith.index_cast %58 : i32 to index
    %c0_21 = arith.constant 0 : index
    %60 = vector.load %arg1[%59, %c0_21] : memref<56x128xf32, #tpu.memory_space<vmem>>, vector<1x128xf32>
    %c8_i32_22 = arith.constant 8 : i32
    %61 = arith.muli %c1_i32_17, %c8_i32_22 : i32
    %c1_i32_23 = arith.constant 1 : i32
    %62 = arith.addi %61, %c1_i32_23 : i32
    %63 = arith.index_cast %62 : i32 to index
    %64 = memref.load %arg0[%63] : memref<64xi32, #tpu.memory_space<smem>>
    %65 = arith.index_cast %64 : i32 to index
    %c0_24 = arith.constant 0 : index
    %66 = vector.load %arg1[%65, %c0_24] : memref<56x128xf32, #tpu.memory_space<vmem>>, vector<1x128xf32>
    %c8_i32_25 = arith.constant 8 : i32
    %67 = arith.muli %c1_i32_17, %c8_i32_25 : i32
    %c2_i32_26 = arith.constant 2 : i32
    %68 = arith.addi %67, %c2_i32_26 : i32
    %69 = arith.index_cast %68 : i32 to index
    %70 = memref.load %arg0[%69] : memref<64xi32, #tpu.memory_space<smem>>
    %71 = arith.index_cast %70 : i32 to index
    %c0_27 = arith.constant 0 : index
    %72 = vector.load %arg1[%71, %c0_27] : memref<56x128xf32, #tpu.memory_space<vmem>>, vector<1x128xf32>
    %c8_i32_28 = arith.constant 8 : i32
    %73 = arith.muli %c1_i32_17, %c8_i32_28 : i32
    %c3_i32_29 = arith.constant 3 : i32
    %74 = arith.addi %73, %c3_i32_29 : i32
    %75 = arith.index_cast %74 : i32 to index
    %76 = memref.load %arg0[%75] : memref<64xi32, #tpu.memory_space<smem>>
    %77 = arith.index_cast %76 : i32 to index
    %c0_30 = arith.constant 0 : index
    %78 = vector.load %arg1[%77, %c0_30] : memref<56x128xf32, #tpu.memory_space<vmem>>, vector<1x128xf32>
    %c8_i32_31 = arith.constant 8 : i32
    %79 = arith.muli %c1_i32_17, %c8_i32_31 : i32
    %c4_i32_32 = arith.constant 4 : i32
    %80 = arith.addi %79, %c4_i32_32 : i32
    %81 = arith.index_cast %80 : i32 to index
    %82 = memref.load %arg0[%81] : memref<64xi32, #tpu.memory_space<smem>>
    %83 = arith.index_cast %82 : i32 to index
    %c0_33 = arith.constant 0 : index
    %84 = vector.load %arg1[%83, %c0_33] : memref<56x128xf32, #tpu.memory_space<vmem>>, vector<1x128xf32>
    %c8_i32_34 = arith.constant 8 : i32
    %85 = arith.muli %c1_i32_17, %c8_i32_34 : i32
    %c5_i32_35 = arith.constant 5 : i32
    %86 = arith.addi %85, %c5_i32_35 : i32
    %87 = arith.index_cast %86 : i32 to index
    %88 = memref.load %arg0[%87] : memref<64xi32, #tpu.memory_space<smem>>
    %89 = arith.index_cast %88 : i32 to index
    %c0_36 = arith.constant 0 : index
    %90 = vector.load %arg1[%89, %c0_36] : memref<56x128xf32, #tpu.memory_space<vmem>>, vector<1x128xf32>
    %c8_i32_37 = arith.constant 8 : i32
    %91 = arith.muli %c1_i32_17, %c8_i32_37 : i32
    %c6_i32_38 = arith.constant 6 : i32
    %92 = arith.addi %91, %c6_i32_38 : i32
    %93 = arith.index_cast %92 : i32 to index
    %94 = memref.load %arg0[%93] : memref<64xi32, #tpu.memory_space<smem>>
    %95 = arith.index_cast %94 : i32 to index
    %c0_39 = arith.constant 0 : index
    %96 = vector.load %arg1[%95, %c0_39] : memref<56x128xf32, #tpu.memory_space<vmem>>, vector<1x128xf32>
    %c8_i32_40 = arith.constant 8 : i32
    %97 = arith.muli %c1_i32_17, %c8_i32_40 : i32
    %c7_i32_41 = arith.constant 7 : i32
    %98 = arith.addi %97, %c7_i32_41 : i32
    %99 = arith.index_cast %98 : i32 to index
    %100 = memref.load %arg0[%99] : memref<64xi32, #tpu.memory_space<smem>>
    %101 = arith.index_cast %100 : i32 to index
    %c0_42 = arith.constant 0 : index
    %102 = vector.load %arg1[%101, %c0_42] : memref<56x128xf32, #tpu.memory_space<vmem>>, vector<1x128xf32>
    %103 = tpu.concatenate %60, %66, %72, %78, %84, %90, %96, %102 in 0 : vector<1x128xf32>, vector<1x128xf32>, vector<1x128xf32>, vector<1x128xf32>, vector<1x128xf32>, vector<1x128xf32>, vector<1x128xf32>, vector<1x128xf32> -> vector<8x128xf32>
    %104 = arith.index_cast %54 : i32 to index
    %c0_43 = arith.constant 0 : index
    %105 = vector.load %arg8[%104, %c0_43] : memref<64x128xf32, #tpu.memory_space<vmem>>, vector<8x128xf32>
    tpu.vector_store %arg8[%104, %c0_43], %103 {strides = array<i32>} : memref<64x128xf32, #tpu.memory_space<vmem>>, vector<8x128xf32>,
    %c2_i32_44 = arith.constant 2 : i32
    %c8_i32_45 = arith.constant 8 : i32
    %106 = arith.muli %c2_i32_44, %c8_i32_45 : i32
    %107 = tpu.assume_multiple %106, 8 : i32
    %c8_i32_46 = arith.constant 8 : i32
    %108 = arith.muli %c2_i32_44, %c8_i32_46 : i32
    %c0_i32_47 = arith.constant 0 : i32
    %109 = arith.addi %108, %c0_i32_47 : i32
    %110 = arith.index_cast %109 : i32 to index
    %111 = memref.load %arg0[%110] : memref<64xi32, #tpu.memory_space<smem>>
    %112 = arith.index_cast %111 : i32 to index
    %c0_48 = arith.constant 0 : index
    %113 = vector.load %arg1[%112, %c0_48] : memref<56x128xf32, #tpu.memory_space<vmem>>, vector<1x128xf32>
    %c8_i32_49 = arith.constant 8 : i32
    %114 = arith.muli %c2_i32_44, %c8_i32_49 : i32
    %c1_i32_50 = arith.constant 1 : i32
    %115 = arith.addi %114, %c1_i32_50 : i32
    %116 = arith.index_cast %115 : i32 to index
    %117 = memref.load %arg0[%116] : memref<64xi32, #tpu.memory_space<smem>>
    %118 = arith.index_cast %117 : i32 to index
    %c0_51 = arith.constant 0 : index
    %119 = vector.load %arg1[%118, %c0_51] : memref<56x128xf32, #tpu.memory_space<vmem>>, vector<1x128xf32>
    %c8_i32_52 = arith.constant 8 : i32
    %120 = arith.muli %c2_i32_44, %c8_i32_52 : i32
    %c2_i32_53 = arith.constant 2 : i32
    %121 = arith.addi %120, %c2_i32_53 : i32
    %122 = arith.index_cast %121 : i32 to index
    %123 = memref.load %arg0[%122] : memref<64xi32, #tpu.memory_space<smem>>
    %124 = arith.index_cast %123 : i32 to index
    %c0_54 = arith.constant 0 : index
    %125 = vector.load %arg1[%124, %c0_54] : memref<56x128xf32, #tpu.memory_space<vmem>>, vector<1x128xf32>
    %c8_i32_55 = arith.constant 8 : i32
    %126 = arith.muli %c2_i32_44, %c8_i32_55 : i32
    %c3_i32_56 = arith.constant 3 : i32
    %127 = arith.addi %126, %c3_i32_56 : i32
    %128 = arith.index_cast %127 : i32 to index
    %129 = memref.load %arg0[%128] : memref<64xi32, #tpu.memory_space<smem>>
    %130 = arith.index_cast %129 : i32 to index
    %c0_57 = arith.constant 0 : index
    %131 = vector.load %arg1[%130, %c0_57] : memref<56x128xf32, #tpu.memory_space<vmem>>, vector<1x128xf32>
    %c8_i32_58 = arith.constant 8 : i32
    %132 = arith.muli %c2_i32_44, %c8_i32_58 : i32
    %c4_i32_59 = arith.constant 4 : i32
    %133 = arith.addi %132, %c4_i32_59 : i32
    %134 = arith.index_cast %133 : i32 to index
    %135 = memref.load %arg0[%134] : memref<64xi32, #tpu.memory_space<smem>>
    %136 = arith.index_cast %135 : i32 to index
    %c0_60 = arith.constant 0 : index
    %137 = vector.load %arg1[%136, %c0_60] : memref<56x128xf32, #tpu.memory_space<vmem>>, vector<1x128xf32>
    %c8_i32_61 = arith.constant 8 : i32
    %138 = arith.muli %c2_i32_44, %c8_i32_61 : i32
    %c5_i32_62 = arith.constant 5 : i32
    %139 = arith.addi %138, %c5_i32_62 : i32
    %140 = arith.index_cast %139 : i32 to index
    %141 = memref.load %arg0[%140] : memref<64xi32, #tpu.memory_space<smem>>
    %142 = arith.index_cast %141 : i32 to index
    %c0_63 = arith.constant 0 : index
    %143 = vector.load %arg1[%142, %c0_63] : memref<56x128xf32, #tpu.memory_space<vmem>>, vector<1x128xf32>
    %c8_i32_64 = arith.constant 8 : i32
    %144 = arith.muli %c2_i32_44, %c8_i32_64 : i32
    %c6_i32_65 = arith.constant 6 : i32
    %145 = arith.addi %144, %c6_i32_65 : i32
    %146 = arith.index_cast %145 : i32 to index
    %147 = memref.load %arg0[%146] : memref<64xi32, #tpu.memory_space<smem>>
    %148 = arith.index_cast %147 : i32 to index
    %c0_66 = arith.constant 0 : index
    %149 = vector.load %arg1[%148, %c0_66] : memref<56x128xf32, #tpu.memory_space<vmem>>, vector<1x128xf32>
    %c8_i32_67 = arith.constant 8 : i32
    %150 = arith.muli %c2_i32_44, %c8_i32_67 : i32
    %c7_i32_68 = arith.constant 7 : i32
    %151 = arith.addi %150, %c7_i32_68 : i32
    %152 = arith.index_cast %151 : i32 to index
    %153 = memref.load %arg0[%152] : memref<64xi32, #tpu.memory_space<smem>>
    %154 = arith.index_cast %153 : i32 to index
    %c0_69 = arith.constant 0 : index
    %155 = vector.load %arg1[%154, %c0_69] : memref<56x128xf32, #tpu.memory_space<vmem>>, vector<1x128xf32>
    %156 = tpu.concatenate %113, %119, %125, %131, %137, %143, %149, %155 in 0 : vector<1x128xf32>, vector<1x128xf32>, vector<1x128xf32>, vector<1x128xf32>, vector<1x128xf32>, vector<1x128xf32>, vector<1x128xf32>, vector<1x128xf32> -> vector<8x128xf32>
    %157 = arith.index_cast %107 : i32 to index
    %c0_70 = arith.constant 0 : index
    %158 = vector.load %arg8[%157, %c0_70] : memref<64x128xf32, #tpu.memory_space<vmem>>, vector<8x128xf32>
    tpu.vector_store %arg8[%157, %c0_70], %156 {strides = array<i32>} : memref<64x128xf32, #tpu.memory_space<vmem>>, vector<8x128xf32>,
    %c3_i32_71 = arith.constant 3 : i32
    %c8_i32_72 = arith.constant 8 : i32
    %159 = arith.muli %c3_i32_71, %c8_i32_72 : i32
    %160 = tpu.assume_multiple %159, 8 : i32
    %c8_i32_73 = arith.constant 8 : i32
    %161 = arith.muli %c3_i32_71, %c8_i32_73 : i32
    %c0_i32_74 = arith.constant 0 : i32
    %162 = arith.addi %161, %c0_i32_74 : i32
    %163 = arith.index_cast %162 : i32 to index
    %164 = memref.load %arg0[%163] : memref<64xi32, #tpu.memory_space<smem>>
    %165 = arith.index_cast %164 : i32 to index
    %c0_75 = arith.constant 0 : index
    %166 = vector.load %arg1[%165, %c0_75] : memref<56x128xf32, #tpu.memory_space<vmem>>, vector<1x128xf32>
    %c8_i32_76 = arith.constant 8 : i32
    %167 = arith.muli %c3_i32_71, %c8_i32_76 : i32
    %c1_i32_77 = arith.constant 1 : i32
    %168 = arith.addi %167, %c1_i32_77 : i32
    %169 = arith.index_cast %168 : i32 to index
    %170 = memref.load %arg0[%169] : memref<64xi32, #tpu.memory_space<smem>>
    %171 = arith.index_cast %170 : i32 to index
    %c0_78 = arith.constant 0 : index
    %172 = vector.load %arg1[%171, %c0_78] : memref<56x128xf32, #tpu.memory_space<vmem>>, vector<1x128xf32>
    %c8_i32_79 = arith.constant 8 : i32
    %173 = arith.muli %c3_i32_71, %c8_i32_79 : i32
    %c2_i32_80 = arith.constant 2 : i32
    %174 = arith.addi %173, %c2_i32_80 : i32
    %175 = arith.index_cast %174 : i32 to index
    %176 = memref.load %arg0[%175] : memref<64xi32, #tpu.memory_space<smem>>
    %177 = arith.index_cast %176 : i32 to index
    %c0_81 = arith.constant 0 : index
    %178 = vector.load %arg1[%177, %c0_81] : memref<56x128xf32, #tpu.memory_space<vmem>>, vector<1x128xf32>
    %c8_i32_82 = arith.constant 8 : i32
    %179 = arith.muli %c3_i32_71, %c8_i32_82 : i32
    %c3_i32_83 = arith.constant 3 : i32
    %180 = arith.addi %179, %c3_i32_83 : i32
    %181 = arith.index_cast %180 : i32 to index
    %182 = memref.load %arg0[%181] : memref<64xi32, #tpu.memory_space<smem>>
    %183 = arith.index_cast %182 : i32 to index
    %c0_84 = arith.constant 0 : index
    %184 = vector.load %arg1[%183, %c0_84] : memref<56x128xf32, #tpu.memory_space<vmem>>, vector<1x128xf32>
    %c8_i32_85 = arith.constant 8 : i32
    %185 = arith.muli %c3_i32_71, %c8_i32_85 : i32
    %c4_i32_86 = arith.constant 4 : i32
    %186 = arith.addi %185, %c4_i32_86 : i32
    %187 = arith.index_cast %186 : i32 to index
    %188 = memref.load %arg0[%187] : memref<64xi32, #tpu.memory_space<smem>>
    %189 = arith.index_cast %188 : i32 to index
    %c0_87 = arith.constant 0 : index
    %190 = vector.load %arg1[%189, %c0_87] : memref<56x128xf32, #tpu.memory_space<vmem>>, vector<1x128xf32>
    %c8_i32_88 = arith.constant 8 : i32
    %191 = arith.muli %c3_i32_71, %c8_i32_88 : i32
    %c5_i32_89 = arith.constant 5 : i32
    %192 = arith.addi %191, %c5_i32_89 : i32
    %193 = arith.index_cast %192 : i32 to index
    %194 = memref.load %arg0[%193] : memref<64xi32, #tpu.memory_space<smem>>
    %195 = arith.index_cast %194 : i32 to index
    %c0_90 = arith.constant 0 : index
    %196 = vector.load %arg1[%195, %c0_90] : memref<56x128xf32, #tpu.memory_space<vmem>>, vector<1x128xf32>
    %c8_i32_91 = arith.constant 8 : i32
    %197 = arith.muli %c3_i32_71, %c8_i32_91 : i32
    %c6_i32_92 = arith.constant 6 : i32
    %198 = arith.addi %197, %c6_i32_92 : i32
    %199 = arith.index_cast %198 : i32 to index
    %200 = memref.load %arg0[%199] : memref<64xi32, #tpu.memory_space<smem>>
    %201 = arith.index_cast %200 : i32 to index
    %c0_93 = arith.constant 0 : index
    %202 = vector.load %arg1[%201, %c0_93] : memref<56x128xf32, #tpu.memory_space<vmem>>, vector<1x128xf32>
    %c8_i32_94 = arith.constant 8 : i32
    %203 = arith.muli %c3_i32_71, %c8_i32_94 : i32
    %c7_i32_95 = arith.constant 7 : i32
    %204 = arith.addi %203, %c7_i32_95 : i32
    %205 = arith.index_cast %204 : i32 to index
    %206 = memref.load %arg0[%205] : memref<64xi32, #tpu.memory_space<smem>>
    %207 = arith.index_cast %206 : i32 to index
    %c0_96 = arith.constant 0 : index
    %208 = vector.load %arg1[%207, %c0_96] : memref<56x128xf32, #tpu.memory_space<vmem>>, vector<1x128xf32>
    %209 = tpu.concatenate %166, %172, %178, %184, %190, %196, %202, %208 in 0 : vector<1x128xf32>, vector<1x128xf32>, vector<1x128xf32>, vector<1x128xf32>, vector<1x128xf32>, vector<1x128xf32>, vector<1x128xf32>, vector<1x128xf32> -> vector<8x128xf32>
    %210 = arith.index_cast %160 : i32 to index
    %c0_97 = arith.constant 0 : index
    %211 = vector.load %arg8[%210, %c0_97] : memref<64x128xf32, #tpu.memory_space<vmem>>, vector<8x128xf32>
    tpu.vector_store %arg8[%210, %c0_97], %209 {strides = array<i32>} : memref<64x128xf32, #tpu.memory_space<vmem>>, vector<8x128xf32>,
    %c4_i32_98 = arith.constant 4 : i32
    %c8_i32_99 = arith.constant 8 : i32
    %212 = arith.muli %c4_i32_98, %c8_i32_99 : i32
    %213 = tpu.assume_multiple %212, 8 : i32
    %c8_i32_100 = arith.constant 8 : i32
    %214 = arith.muli %c4_i32_98, %c8_i32_100 : i32
    %c0_i32_101 = arith.constant 0 : i32
    %215 = arith.addi %214, %c0_i32_101 : i32
    %216 = arith.index_cast %215 : i32 to index
    %217 = memref.load %arg0[%216] : memref<64xi32, #tpu.memory_space<smem>>
    %218 = arith.index_cast %217 : i32 to index
    %c0_102 = arith.constant 0 : index
    %219 = vector.load %arg1[%218, %c0_102] : memref<56x128xf32, #tpu.memory_space<vmem>>, vector<1x128xf32>
    %c8_i32_103 = arith.constant 8 : i32
    %220 = arith.muli %c4_i32_98, %c8_i32_103 : i32
    %c1_i32_104 = arith.constant 1 : i32
    %221 = arith.addi %220, %c1_i32_104 : i32
    %222 = arith.index_cast %221 : i32 to index
    %223 = memref.load %arg0[%222] : memref<64xi32, #tpu.memory_space<smem>>
    %224 = arith.index_cast %223 : i32 to index
    %c0_105 = arith.constant 0 : index
    %225 = vector.load %arg1[%224, %c0_105] : memref<56x128xf32, #tpu.memory_space<vmem>>, vector<1x128xf32>
    %c8_i32_106 = arith.constant 8 : i32
    %226 = arith.muli %c4_i32_98, %c8_i32_106 : i32
    %c2_i32_107 = arith.constant 2 : i32
    %227 = arith.addi %226, %c2_i32_107 : i32
    %228 = arith.index_cast %227 : i32 to index
    %229 = memref.load %arg0[%228] : memref<64xi32, #tpu.memory_space<smem>>
    %230 = arith.index_cast %229 : i32 to index
    %c0_108 = arith.constant 0 : index
    %231 = vector.load %arg1[%230, %c0_108] : memref<56x128xf32, #tpu.memory_space<vmem>>, vector<1x128xf32>
    %c8_i32_109 = arith.constant 8 : i32
    %232 = arith.muli %c4_i32_98, %c8_i32_109 : i32
    %c3_i32_110 = arith.constant 3 : i32
    %233 = arith.addi %232, %c3_i32_110 : i32
    %234 = arith.index_cast %233 : i32 to index
    %235 = memref.load %arg0[%234] : memref<64xi32, #tpu.memory_space<smem>>
    %236 = arith.index_cast %235 : i32 to index
    %c0_111 = arith.constant 0 : index
    %237 = vector.load %arg1[%236, %c0_111] : memref<56x128xf32, #tpu.memory_space<vmem>>, vector<1x128xf32>
    %c8_i32_112 = arith.constant 8 : i32
    %238 = arith.muli %c4_i32_98, %c8_i32_112 : i32
    %c4_i32_113 = arith.constant 4 : i32
    %239 = arith.addi %238, %c4_i32_113 : i32
    %240 = arith.index_cast %239 : i32 to index
    %241 = memref.load %arg0[%240] : memref<64xi32, #tpu.memory_space<smem>>
    %242 = arith.index_cast %241 : i32 to index
    %c0_114 = arith.constant 0 : index
    %243 = vector.load %arg1[%242, %c0_114] : memref<56x128xf32, #tpu.memory_space<vmem>>, vector<1x128xf32>
    %c8_i32_115 = arith.constant 8 : i32
    %244 = arith.muli %c4_i32_98, %c8_i32_115 : i32
    %c5_i32_116 = arith.constant 5 : i32
    %245 = arith.addi %244, %c5_i32_116 : i32
    %246 = arith.index_cast %245 : i32 to index
    %247 = memref.load %arg0[%246] : memref<64xi32, #tpu.memory_space<smem>>
    %248 = arith.index_cast %247 : i32 to index
    %c0_117 = arith.constant 0 : index
    %249 = vector.load %arg1[%248, %c0_117] : memref<56x128xf32, #tpu.memory_space<vmem>>, vector<1x128xf32>
    %c8_i32_118 = arith.constant 8 : i32
    %250 = arith.muli %c4_i32_98, %c8_i32_118 : i32
    %c6_i32_119 = arith.constant 6 : i32
    %251 = arith.addi %250, %c6_i32_119 : i32
    %252 = arith.index_cast %251 : i32 to index
    %253 = memref.load %arg0[%252] : memref<64xi32, #tpu.memory_space<smem>>
    %254 = arith.index_cast %253 : i32 to index
    %c0_120 = arith.constant 0 : index
    %255 = vector.load %arg1[%254, %c0_120] : memref<56x128xf32, #tpu.memory_space<vmem>>, vector<1x128xf32>
    %c8_i32_121 = arith.constant 8 : i32
    %256 = arith.muli %c4_i32_98, %c8_i32_121 : i32
    %c7_i32_122 = arith.constant 7 : i32
    %257 = arith.addi %256, %c7_i32_122 : i32
    %258 = arith.index_cast %257 : i32 to index
    %259 = memref.load %arg0[%258] : memref<64xi32, #tpu.memory_space<smem>>
    %260 = arith.index_cast %259 : i32 to index
    %c0_123 = arith.constant 0 : index
    %261 = vector.load %arg1[%260, %c0_123] : memref<56x128xf32, #tpu.memory_space<vmem>>, vector<1x128xf32>
    %262 = tpu.concatenate %219, %225, %231, %237, %243, %249, %255, %261 in 0 : vector<1x128xf32>, vector<1x128xf32>, vector<1x128xf32>, vector<1x128xf32>, vector<1x128xf32>, vector<1x128xf32>, vector<1x128xf32>, vector<1x128xf32> -> vector<8x128xf32>
    %263 = arith.index_cast %213 : i32 to index
    %c0_124 = arith.constant 0 : index
    %264 = vector.load %arg8[%263, %c0_124] : memref<64x128xf32, #tpu.memory_space<vmem>>, vector<8x128xf32>
    tpu.vector_store %arg8[%263, %c0_124], %262 {strides = array<i32>} : memref<64x128xf32, #tpu.memory_space<vmem>>, vector<8x128xf32>,
    %c5_i32_125 = arith.constant 5 : i32
    %c8_i32_126 = arith.constant 8 : i32
    %265 = arith.muli %c5_i32_125, %c8_i32_126 : i32
    %266 = tpu.assume_multiple %265, 8 : i32
    %c8_i32_127 = arith.constant 8 : i32
    %267 = arith.muli %c5_i32_125, %c8_i32_127 : i32
    %c0_i32_128 = arith.constant 0 : i32
    %268 = arith.addi %267, %c0_i32_128 : i32
    %269 = arith.index_cast %268 : i32 to index
    %270 = memref.load %arg0[%269] : memref<64xi32, #tpu.memory_space<smem>>
    %271 = arith.index_cast %270 : i32 to index
    %c0_129 = arith.constant 0 : index
    %272 = vector.load %arg1[%271, %c0_129] : memref<56x128xf32, #tpu.memory_space<vmem>>, vector<1x128xf32>
    %c8_i32_130 = arith.constant 8 : i32
    %273 = arith.muli %c5_i32_125, %c8_i32_130 : i32
    %c1_i32_131 = arith.constant 1 : i32
    %274 = arith.addi %273, %c1_i32_131 : i32
    %275 = arith.index_cast %274 : i32 to index
    %276 = memref.load %arg0[%275] : memref<64xi32, #tpu.memory_space<smem>>
    %277 = arith.index_cast %276 : i32 to index
    %c0_132 = arith.constant 0 : index
    %278 = vector.load %arg1[%277, %c0_132] : memref<56x128xf32, #tpu.memory_space<vmem>>, vector<1x128xf32>
    %c8_i32_133 = arith.constant 8 : i32
    %279 = arith.muli %c5_i32_125, %c8_i32_133 : i32
    %c2_i32_134 = arith.constant 2 : i32
    %280 = arith.addi %279, %c2_i32_134 : i32
    %281 = arith.index_cast %280 : i32 to index
    %282 = memref.load %arg0[%281] : memref<64xi32, #tpu.memory_space<smem>>
    %283 = arith.index_cast %282 : i32 to index
    %c0_135 = arith.constant 0 : index
    %284 = vector.load %arg1[%283, %c0_135] : memref<56x128xf32, #tpu.memory_space<vmem>>, vector<1x128xf32>
    %c8_i32_136 = arith.constant 8 : i32
    %285 = arith.muli %c5_i32_125, %c8_i32_136 : i32
    %c3_i32_137 = arith.constant 3 : i32
    %286 = arith.addi %285, %c3_i32_137 : i32
    %287 = arith.index_cast %286 : i32 to index
    %288 = memref.load %arg0[%287] : memref<64xi32, #tpu.memory_space<smem>>
    %289 = arith.index_cast %288 : i32 to index
    %c0_138 = arith.constant 0 : index
    %290 = vector.load %arg1[%289, %c0_138] : memref<56x128xf32, #tpu.memory_space<vmem>>, vector<1x128xf32>
    %c8_i32_139 = arith.constant 8 : i32
    %291 = arith.muli %c5_i32_125, %c8_i32_139 : i32
    %c4_i32_140 = arith.constant 4 : i32
    %292 = arith.addi %291, %c4_i32_140 : i32
    %293 = arith.index_cast %292 : i32 to index
    %294 = memref.load %arg0[%293] : memref<64xi32, #tpu.memory_space<smem>>
    %295 = arith.index_cast %294 : i32 to index
    %c0_141 = arith.constant 0 : index
    %296 = vector.load %arg1[%295, %c0_141] : memref<56x128xf32, #tpu.memory_space<vmem>>, vector<1x128xf32>
    %c8_i32_142 = arith.constant 8 : i32
    %297 = arith.muli %c5_i32_125, %c8_i32_142 : i32
    %c5_i32_143 = arith.constant 5 : i32
    %298 = arith.addi %297, %c5_i32_143 : i32
    %299 = arith.index_cast %298 : i32 to index
    %300 = memref.load %arg0[%299] : memref<64xi32, #tpu.memory_space<smem>>
    %301 = arith.index_cast %300 : i32 to index
    %c0_144 = arith.constant 0 : index
    %302 = vector.load %arg1[%301, %c0_144] : memref<56x128xf32, #tpu.memory_space<vmem>>, vector<1x128xf32>
    %c8_i32_145 = arith.constant 8 : i32
    %303 = arith.muli %c5_i32_125, %c8_i32_145 : i32
    %c6_i32_146 = arith.constant 6 : i32
    %304 = arith.addi %303, %c6_i32_146 : i32
    %305 = arith.index_cast %304 : i32 to index
    %306 = memref.load %arg0[%305] : memref<64xi32, #tpu.memory_space<smem>>
    %307 = arith.index_cast %306 : i32 to index
    %c0_147 = arith.constant 0 : index
    %308 = vector.load %arg1[%307, %c0_147] : memref<56x128xf32, #tpu.memory_space<vmem>>, vector<1x128xf32>
    %c8_i32_148 = arith.constant 8 : i32
    %309 = arith.muli %c5_i32_125, %c8_i32_148 : i32
    %c7_i32_149 = arith.constant 7 : i32
    %310 = arith.addi %309, %c7_i32_149 : i32
    %311 = arith.index_cast %310 : i32 to index
    %312 = memref.load %arg0[%311] : memref<64xi32, #tpu.memory_space<smem>>
    %313 = arith.index_cast %312 : i32 to index
    %c0_150 = arith.constant 0 : index
    %314 = vector.load %arg1[%313, %c0_150] : memref<56x128xf32, #tpu.memory_space<vmem>>, vector<1x128xf32>
    %315 = tpu.concatenate %272, %278, %284, %290, %296, %302, %308, %314 in 0 : vector<1x128xf32>, vector<1x128xf32>, vector<1x128xf32>, vector<1x128xf32>, vector<1x128xf32>, vector<1x128xf32>, vector<1x128xf32>, vector<1x128xf32> -> vector<8x128xf32>
    %316 = arith.index_cast %266 : i32 to index
    %c0_151 = arith.constant 0 : index
    %317 = vector.load %arg8[%316, %c0_151] : memref<64x128xf32, #tpu.memory_space<vmem>>, vector<8x128xf32>
    tpu.vector_store %arg8[%316, %c0_151], %315 {strides = array<i32>} : memref<64x128xf32, #tpu.memory_space<vmem>>, vector<8x128xf32>,
    %c6_i32_152 = arith.constant 6 : i32
    %c8_i32_153 = arith.constant 8 : i32
    %318 = arith.muli %c6_i32_152, %c8_i32_153 : i32
    %319 = tpu.assume_multiple %318, 8 : i32
    %c8_i32_154 = arith.constant 8 : i32
    %320 = arith.muli %c6_i32_152, %c8_i32_154 : i32
    %c0_i32_155 = arith.constant 0 : i32
    %321 = arith.addi %320, %c0_i32_155 : i32
    %322 = arith.index_cast %321 : i32 to index
    %323 = memref.load %arg0[%322] : memref<64xi32, #tpu.memory_space<smem>>
    %324 = arith.index_cast %323 : i32 to index
    %c0_156 = arith.constant 0 : index
    %325 = vector.load %arg1[%324, %c0_156] : memref<56x128xf32, #tpu.memory_space<vmem>>, vector<1x128xf32>
    %c8_i32_157 = arith.constant 8 : i32
    %326 = arith.muli %c6_i32_152, %c8_i32_157 : i32
    %c1_i32_158 = arith.constant 1 : i32
    %327 = arith.addi %326, %c1_i32_158 : i32
    %328 = arith.index_cast %327 : i32 to index
    %329 = memref.load %arg0[%328] : memref<64xi32, #tpu.memory_space<smem>>
    %330 = arith.index_cast %329 : i32 to index
    %c0_159 = arith.constant 0 : index
    %331 = vector.load %arg1[%330, %c0_159] : memref<56x128xf32, #tpu.memory_space<vmem>>, vector<1x128xf32>
    %c8_i32_160 = arith.constant 8 : i32
    %332 = arith.muli %c6_i32_152, %c8_i32_160 : i32
    %c2_i32_161 = arith.constant 2 : i32
    %333 = arith.addi %332, %c2_i32_161 : i32
    %334 = arith.index_cast %333 : i32 to index
    %335 = memref.load %arg0[%334] : memref<64xi32, #tpu.memory_space<smem>>
    %336 = arith.index_cast %335 : i32 to index
    %c0_162 = arith.constant 0 : index
    %337 = vector.load %arg1[%336, %c0_162] : memref<56x128xf32, #tpu.memory_space<vmem>>, vector<1x128xf32>
    %c8_i32_163 = arith.constant 8 : i32
    %338 = arith.muli %c6_i32_152, %c8_i32_163 : i32
    %c3_i32_164 = arith.constant 3 : i32
    %339 = arith.addi %338, %c3_i32_164 : i32
    %340 = arith.index_cast %339 : i32 to index
    %341 = memref.load %arg0[%340] : memref<64xi32, #tpu.memory_space<smem>>
    %342 = arith.index_cast %341 : i32 to index
    %c0_165 = arith.constant 0 : index
    %343 = vector.load %arg1[%342, %c0_165] : memref<56x128xf32, #tpu.memory_space<vmem>>, vector<1x128xf32>
    %c8_i32_166 = arith.constant 8 : i32
    %344 = arith.muli %c6_i32_152, %c8_i32_166 : i32
    %c4_i32_167 = arith.constant 4 : i32
    %345 = arith.addi %344, %c4_i32_167 : i32
    %346 = arith.index_cast %345 : i32 to index
    %347 = memref.load %arg0[%346] : memref<64xi32, #tpu.memory_space<smem>>
    %348 = arith.index_cast %347 : i32 to index
    %c0_168 = arith.constant 0 : index
    %349 = vector.load %arg1[%348, %c0_168] : memref<56x128xf32, #tpu.memory_space<vmem>>, vector<1x128xf32>
    %c8_i32_169 = arith.constant 8 : i32
    %350 = arith.muli %c6_i32_152, %c8_i32_169 : i32
    %c5_i32_170 = arith.constant 5 : i32
    %351 = arith.addi %350, %c5_i32_170 : i32
    %352 = arith.index_cast %351 : i32 to index
    %353 = memref.load %arg0[%352] : memref<64xi32, #tpu.memory_space<smem>>
    %354 = arith.index_cast %353 : i32 to index
    %c0_171 = arith.constant 0 : index
    %355 = vector.load %arg1[%354, %c0_171] : memref<56x128xf32, #tpu.memory_space<vmem>>, vector<1x128xf32>
    %c8_i32_172 = arith.constant 8 : i32
    %356 = arith.muli %c6_i32_152, %c8_i32_172 : i32
    %c6_i32_173 = arith.constant 6 : i32
    %357 = arith.addi %356, %c6_i32_173 : i32
    %358 = arith.index_cast %357 : i32 to index
    %359 = memref.load %arg0[%358] : memref<64xi32, #tpu.memory_space<smem>>
    %360 = arith.index_cast %359 : i32 to index
    %c0_174 = arith.constant 0 : index
    %361 = vector.load %arg1[%360, %c0_174] : memref<56x128xf32, #tpu.memory_space<vmem>>, vector<1x128xf32>
    %c8_i32_175 = arith.constant 8 : i32
    %362 = arith.muli %c6_i32_152, %c8_i32_175 : i32
    %c7_i32_176 = arith.constant 7 : i32
    %363 = arith.addi %362, %c7_i32_176 : i32
    %364 = arith.index_cast %363 : i32 to index
    %365 = memref.load %arg0[%364] : memref<64xi32, #tpu.memory_space<smem>>
    %366 = arith.index_cast %365 : i32 to index
    %c0_177 = arith.constant 0 : index
    %367 = vector.load %arg1[%366, %c0_177] : memref<56x128xf32, #tpu.memory_space<vmem>>, vector<1x128xf32>
    %368 = tpu.concatenate %325, %331, %337, %343, %349, %355, %361, %367 in 0 : vector<1x128xf32>, vector<1x128xf32>, vector<1x128xf32>, vector<1x128xf32>, vector<1x128xf32>, vector<1x128xf32>, vector<1x128xf32>, vector<1x128xf32> -> vector<8x128xf32>
    %369 = arith.index_cast %319 : i32 to index
    %c0_178 = arith.constant 0 : index
    %370 = vector.load %arg8[%369, %c0_178] : memref<64x128xf32, #tpu.memory_space<vmem>>, vector<8x128xf32>
    tpu.vector_store %arg8[%369, %c0_178], %368 {strides = array<i32>} : memref<64x128xf32, #tpu.memory_space<vmem>>, vector<8x128xf32>,
    %c7_i32_179 = arith.constant 7 : i32
    %c8_i32_180 = arith.constant 8 : i32
    %371 = arith.muli %c7_i32_179, %c8_i32_180 : i32
    %372 = tpu.assume_multiple %371, 8 : i32
    %c8_i32_181 = arith.constant 8 : i32
    %373 = arith.muli %c7_i32_179, %c8_i32_181 : i32
    %c0_i32_182 = arith.constant 0 : i32
    %374 = arith.addi %373, %c0_i32_182 : i32
    %375 = arith.index_cast %374 : i32 to index
    %376 = memref.load %arg0[%375] : memref<64xi32, #tpu.memory_space<smem>>
    %377 = arith.index_cast %376 : i32 to index
    %c0_183 = arith.constant 0 : index
    %378 = vector.load %arg1[%377, %c0_183] : memref<56x128xf32, #tpu.memory_space<vmem>>, vector<1x128xf32>
    %c8_i32_184 = arith.constant 8 : i32
    %379 = arith.muli %c7_i32_179, %c8_i32_184 : i32
    %c1_i32_185 = arith.constant 1 : i32
    %380 = arith.addi %379, %c1_i32_185 : i32
    %381 = arith.index_cast %380 : i32 to index
    %382 = memref.load %arg0[%381] : memref<64xi32, #tpu.memory_space<smem>>
    %383 = arith.index_cast %382 : i32 to index
    %c0_186 = arith.constant 0 : index
    %384 = vector.load %arg1[%383, %c0_186] : memref<56x128xf32, #tpu.memory_space<vmem>>, vector<1x128xf32>
    %c8_i32_187 = arith.constant 8 : i32
    %385 = arith.muli %c7_i32_179, %c8_i32_187 : i32
    %c2_i32_188 = arith.constant 2 : i32
    %386 = arith.addi %385, %c2_i32_188 : i32
    %387 = arith.index_cast %386 : i32 to index
    %388 = memref.load %arg0[%387] : memref<64xi32, #tpu.memory_space<smem>>
    %389 = arith.index_cast %388 : i32 to index
    %c0_189 = arith.constant 0 : index
    %390 = vector.load %arg1[%389, %c0_189] : memref<56x128xf32, #tpu.memory_space<vmem>>, vector<1x128xf32>
    %c8_i32_190 = arith.constant 8 : i32
    %391 = arith.muli %c7_i32_179, %c8_i32_190 : i32
    %c3_i32_191 = arith.constant 3 : i32
    %392 = arith.addi %391, %c3_i32_191 : i32
    %393 = arith.index_cast %392 : i32 to index
    %394 = memref.load %arg0[%393] : memref<64xi32, #tpu.memory_space<smem>>
    %395 = arith.index_cast %394 : i32 to index
    %c0_192 = arith.constant 0 : index
    %396 = vector.load %arg1[%395, %c0_192] : memref<56x128xf32, #tpu.memory_space<vmem>>, vector<1x128xf32>
    %c8_i32_193 = arith.constant 8 : i32
    %397 = arith.muli %c7_i32_179, %c8_i32_193 : i32
    %c4_i32_194 = arith.constant 4 : i32
    %398 = arith.addi %397, %c4_i32_194 : i32
    %399 = arith.index_cast %398 : i32 to index
    %400 = memref.load %arg0[%399] : memref<64xi32, #tpu.memory_space<smem>>
    %401 = arith.index_cast %400 : i32 to index
    %c0_195 = arith.constant 0 : index
    %402 = vector.load %arg1[%401, %c0_195] : memref<56x128xf32, #tpu.memory_space<vmem>>, vector<1x128xf32>
    %c8_i32_196 = arith.constant 8 : i32
    %403 = arith.muli %c7_i32_179, %c8_i32_196 : i32
    %c5_i32_197 = arith.constant 5 : i32
    %404 = arith.addi %403, %c5_i32_197 : i32
    %405 = arith.index_cast %404 : i32 to index
    %406 = memref.load %arg0[%405] : memref<64xi32, #tpu.memory_space<smem>>
    %407 = arith.index_cast %406 : i32 to index
    %c0_198 = arith.constant 0 : index
    %408 = vector.load %arg1[%407, %c0_198] : memref<56x128xf32, #tpu.memory_space<vmem>>, vector<1x128xf32>
    %c8_i32_199 = arith.constant 8 : i32
    %409 = arith.muli %c7_i32_179, %c8_i32_199 : i32
    %c6_i32_200 = arith.constant 6 : i32
    %410 = arith.addi %409, %c6_i32_200 : i32
    %411 = arith.index_cast %410 : i32 to index
    %412 = memref.load %arg0[%411] : memref<64xi32, #tpu.memory_space<smem>>
    %413 = arith.index_cast %412 : i32 to index
    %c0_201 = arith.constant 0 : index
    %414 = vector.load %arg1[%413, %c0_201] : memref<56x128xf32, #tpu.memory_space<vmem>>, vector<1x128xf32>
    %c8_i32_202 = arith.constant 8 : i32
    %415 = arith.muli %c7_i32_179, %c8_i32_202 : i32
    %c7_i32_203 = arith.constant 7 : i32
    %416 = arith.addi %415, %c7_i32_203 : i32
    %417 = arith.index_cast %416 : i32 to index
    %418 = memref.load %arg0[%417] : memref<64xi32, #tpu.memory_space<smem>>
    %419 = arith.index_cast %418 : i32 to index
    %c0_204 = arith.constant 0 : index
    %420 = vector.load %arg1[%419, %c0_204] : memref<56x128xf32, #tpu.memory_space<vmem>>, vector<1x128xf32>
    %421 = tpu.concatenate %378, %384, %390, %396, %402, %408, %414, %420 in 0 : vector<1x128xf32>, vector<1x128xf32>, vector<1x128xf32>, vector<1x128xf32>, vector<1x128xf32>, vector<1x128xf32>, vector<1x128xf32>, vector<1x128xf32> -> vector<8x128xf32>
    %422 = arith.index_cast %372 : i32 to index
    %c0_205 = arith.constant 0 : index
    %423 = vector.load %arg8[%422, %c0_205] : memref<64x128xf32, #tpu.memory_space<vmem>>, vector<8x128xf32>
    tpu.vector_store %arg8[%422, %c0_205], %421 {strides = array<i32>} : memref<64x128xf32, #tpu.memory_space<vmem>>, vector<8x128xf32>,
    %c8_i32_206 = arith.constant 8 : i32
    %c0_207 = arith.constant 0 : index
    %c0_208 = arith.constant 0 : index
    %424 = vector.load %arg8[%c0_207, %c0_208] : memref<64x128xf32, #tpu.memory_space<vmem>>, vector<64x128xf32>
    %c0_209 = arith.constant 0 : index
    %c0_210 = arith.constant 0 : index
    %425 = vector.load %arg2[%c0_209, %c0_210] : memref<128x128xf32, #tpu.memory_space<vmem>>, vector<128x128xf32>
    %cst = arith.constant dense<0.000000e+00> : vector<64x128xf32>
    %426 = tpu.matmul %424, %425, %cst {dimension_numbers = #tpu.dot_dimension_numbers<[1], [0], [0], [1], [0, 0, 1, 1], [], []>} : vector<64x128xf32>, vector<128x128xf32>, vector<64x128xf32> -> vector<64x128xf32>
    %c0_211 = arith.constant 0 : index
    %c0_212 = arith.constant 0 : index
    %427 = vector.load %arg4[%c0_211, %c0_212] : memref<1x128xf32, #tpu.memory_space<vmem>>, vector<1x128xf32>
    %428 = vector.broadcast %427 : vector<1x128xf32> to vector<64x128xf32>
    %429 = arith.addf %426, %428 : vector<64x128xf32>
    %c0_213 = arith.constant 0 : index
    %c0_214 = arith.constant 0 : index
    %430 = vector.load %arg9[%c0_213, %c0_214] : memref<64x128xf32, #tpu.memory_space<vmem>>, vector<64x128xf32>
    tpu.vector_store %arg9[%c0_213, %c0_214], %429 {strides = array<i32>} : memref<64x128xf32, #tpu.memory_space<vmem>>, vector<64x128xf32>,
    %c0_215 = arith.constant 0 : index
    %c0_216 = arith.constant 0 : index
    %431 = vector.load %arg3[%c0_215, %c0_216] : memref<128x128xf32, #tpu.memory_space<vmem>>, vector<128x128xf32>
    %cst_217 = arith.constant 0.000000e+00 : f32
    %432 = vector.broadcast %cst_217 : f32 to vector<8x128xf32>
    %c0_i32_218 = arith.constant 0 : i32
    %c8_i32_219 = arith.constant 8 : i32
    %433 = arith.muli %c0_i32_218, %c8_i32_219 : i32
    %434 = tpu.assume_multiple %433, 8 : i32
    %435 = arith.index_cast %434 : i32 to index
    %c0_220 = arith.constant 0 : index
    %436 = vector.load %arg9[%435, %c0_220] : memref<64x128xf32, #tpu.memory_space<vmem>>, vector<8x128xf32>
    %cst_221 = arith.constant dense<0.000000e+00> : vector<8x128xf32>
    %437 = tpu.matmul %432, %431, %cst_221 {dimension_numbers = #tpu.dot_dimension_numbers<[1], [0], [0], [1], [0, 0, 1, 1], [], []>} : vector<8x128xf32>, vector<128x128xf32>, vector<8x128xf32> -> vector<8x128xf32>
    %438 = arith.addf %436, %437 : vector<8x128xf32>
    %439 = math.tanh %438 : vector<8x128xf32>
    %c1_i32_222 = arith.constant 1 : i32
    %c8_i32_223 = arith.constant 8 : i32
    %440 = arith.muli %c1_i32_222, %c8_i32_223 : i32
    %441 = tpu.assume_multiple %440, 8 : i32
    %442 = arith.index_cast %441 : i32 to index
    %c0_224 = arith.constant 0 : index
    %443 = vector.load %arg9[%442, %c0_224] : memref<64x128xf32, #tpu.memory_space<vmem>>, vector<8x128xf32>
    %cst_225 = arith.constant dense<0.000000e+00> : vector<8x128xf32>
    %444 = tpu.matmul %439, %431, %cst_225 {dimension_numbers = #tpu.dot_dimension_numbers<[1], [0], [0], [1], [0, 0, 1, 1], [], []>} : vector<8x128xf32>, vector<128x128xf32>, vector<8x128xf32> -> vector<8x128xf32>
    %445 = arith.addf %443, %444 : vector<8x128xf32>
    %446 = math.tanh %445 : vector<8x128xf32>
    %c2_i32_226 = arith.constant 2 : i32
    %c8_i32_227 = arith.constant 8 : i32
    %447 = arith.muli %c2_i32_226, %c8_i32_227 : i32
    %448 = tpu.assume_multiple %447, 8 : i32
    %449 = arith.index_cast %448 : i32 to index
    %c0_228 = arith.constant 0 : index
    %450 = vector.load %arg9[%449, %c0_228] : memref<64x128xf32, #tpu.memory_space<vmem>>, vector<8x128xf32>
    %cst_229 = arith.constant dense<0.000000e+00> : vector<8x128xf32>
    %451 = tpu.matmul %446, %431, %cst_229 {dimension_numbers = #tpu.dot_dimension_numbers<[1], [0], [0], [1], [0, 0, 1, 1], [], []>} : vector<8x128xf32>, vector<128x128xf32>, vector<8x128xf32> -> vector<8x128xf32>
    %452 = arith.addf %450, %451 : vector<8x128xf32>
    %453 = math.tanh %452 : vector<8x128xf32>
    %c3_i32_230 = arith.constant 3 : i32
    %c8_i32_231 = arith.constant 8 : i32
    %454 = arith.muli %c3_i32_230, %c8_i32_231 : i32
    %455 = tpu.assume_multiple %454, 8 : i32
    %456 = arith.index_cast %455 : i32 to index
    %c0_232 = arith.constant 0 : index
    %457 = vector.load %arg9[%456, %c0_232] : memref<64x128xf32, #tpu.memory_space<vmem>>, vector<8x128xf32>
    %cst_233 = arith.constant dense<0.000000e+00> : vector<8x128xf32>
    %458 = tpu.matmul %453, %431, %cst_233 {dimension_numbers = #tpu.dot_dimension_numbers<[1], [0], [0], [1], [0, 0, 1, 1], [], []>} : vector<8x128xf32>, vector<128x128xf32>, vector<8x128xf32> -> vector<8x128xf32>
    %459 = arith.addf %457, %458 : vector<8x128xf32>
    %460 = math.tanh %459 : vector<8x128xf32>
    %c4_i32_234 = arith.constant 4 : i32
    %c8_i32_235 = arith.constant 8 : i32
    %461 = arith.muli %c4_i32_234, %c8_i32_235 : i32
    %462 = tpu.assume_multiple %461, 8 : i32
    %463 = arith.index_cast %462 : i32 to index
    %c0_236 = arith.constant 0 : index
    %464 = vector.load %arg9[%463, %c0_236] : memref<64x128xf32, #tpu.memory_space<vmem>>, vector<8x128xf32>
    %cst_237 = arith.constant dense<0.000000e+00> : vector<8x128xf32>
    %465 = tpu.matmul %460, %431, %cst_237 {dimension_numbers = #tpu.dot_dimension_numbers<[1], [0], [0], [1], [0, 0, 1, 1], [], []>} : vector<8x128xf32>, vector<128x128xf32>, vector<8x128xf32> -> vector<8x128xf32>
    %466 = arith.addf %464, %465 : vector<8x128xf32>
    %467 = math.tanh %466 : vector<8x128xf32>
    %c5_i32_238 = arith.constant 5 : i32
    %c8_i32_239 = arith.constant 8 : i32
    %468 = arith.muli %c5_i32_238, %c8_i32_239 : i32
    %469 = tpu.assume_multiple %468, 8 : i32
    %470 = arith.index_cast %469 : i32 to index
    %c0_240 = arith.constant 0 : index
    %471 = vector.load %arg9[%470, %c0_240] : memref<64x128xf32, #tpu.memory_space<vmem>>, vector<8x128xf32>
    %cst_241 = arith.constant dense<0.000000e+00> : vector<8x128xf32>
    %472 = tpu.matmul %467, %431, %cst_241 {dimension_numbers = #tpu.dot_dimension_numbers<[1], [0], [0], [1], [0, 0, 1, 1], [], []>} : vector<8x128xf32>, vector<128x128xf32>, vector<8x128xf32> -> vector<8x128xf32>
    %473 = arith.addf %471, %472 : vector<8x128xf32>
    %474 = math.tanh %473 : vector<8x128xf32>
    %c6_i32_242 = arith.constant 6 : i32
    %c8_i32_243 = arith.constant 8 : i32
    %475 = arith.muli %c6_i32_242, %c8_i32_243 : i32
    %476 = tpu.assume_multiple %475, 8 : i32
    %477 = arith.index_cast %476 : i32 to index
    %c0_244 = arith.constant 0 : index
    %478 = vector.load %arg9[%477, %c0_244] : memref<64x128xf32, #tpu.memory_space<vmem>>, vector<8x128xf32>
    %cst_245 = arith.constant dense<0.000000e+00> : vector<8x128xf32>
    %479 = tpu.matmul %474, %431, %cst_245 {dimension_numbers = #tpu.dot_dimension_numbers<[1], [0], [0], [1], [0, 0, 1, 1], [], []>} : vector<8x128xf32>, vector<128x128xf32>, vector<8x128xf32> -> vector<8x128xf32>
    %480 = arith.addf %478, %479 : vector<8x128xf32>
    %481 = math.tanh %480 : vector<8x128xf32>
    %c7_i32_246 = arith.constant 7 : i32
    %c8_i32_247 = arith.constant 8 : i32
    %482 = arith.muli %c7_i32_246, %c8_i32_247 : i32
    %483 = tpu.assume_multiple %482, 8 : i32
    %484 = arith.index_cast %483 : i32 to index
    %c0_248 = arith.constant 0 : index
    %485 = vector.load %arg9[%484, %c0_248] : memref<64x128xf32, #tpu.memory_space<vmem>>, vector<8x128xf32>
    %cst_249 = arith.constant dense<0.000000e+00> : vector<8x128xf32>
    %486 = tpu.matmul %481, %431, %cst_249 {dimension_numbers = #tpu.dot_dimension_numbers<[1], [0], [0], [1], [0, 0, 1, 1], [], []>} : vector<8x128xf32>, vector<128x128xf32>, vector<8x128xf32> -> vector<8x128xf32>
    %487 = arith.addf %485, %486 : vector<8x128xf32>
    %488 = math.tanh %487 : vector<8x128xf32>
    %c8_i32_250 = arith.constant 8 : i32
    %c0_251 = arith.constant 0 : index
    %c0_252 = arith.constant 0 : index
    %489 = vector.load %arg5[%c0_251, %c0_252] : memref<128x128xf32, #tpu.memory_space<vmem>>, vector<128x128xf32>
    %cst_253 = arith.constant dense<0.000000e+00> : vector<8x128xf32>
    %490 = tpu.matmul %488, %489, %cst_253 {dimension_numbers = #tpu.dot_dimension_numbers<[1], [0], [0], [1], [0, 0, 1, 1], [], []>} : vector<8x128xf32>, vector<128x128xf32>, vector<8x128xf32> -> vector<8x128xf32>
    %c0_254 = arith.constant 0 : index
    %c0_255 = arith.constant 0 : index
    %491 = vector.load %arg6[%c0_254, %c0_255] : memref<1x128xf32, #tpu.memory_space<vmem>>, vector<1x128xf32>
    %492 = vector.broadcast %491 : vector<1x128xf32> to vector<8x128xf32>
    %493 = arith.addf %490, %492 : vector<8x128xf32>
    %c0_256 = arith.constant 0 : index
    %c0_257 = arith.constant 0 : index
    %494 = vector.load %arg7[%c0_256, %c0_257] : memref<8x128xf32, #tpu.memory_space<vmem>>, vector<8x128xf32>
    tpu.vector_store %arg7[%c0_256, %c0_257], %493 {strides = array<i32>} : memref<8x128xf32, #tpu.memory_space<vmem>>, vector<8x128xf32>,
    return
  }
}

</mosaic_0001>

<llo_original>
// kernel: rnn_forward.1
$region0: #{rnn_forward.1}
  #allocation0 [shape = 'u32[]', space=smem, size = 0x4, offset = 0x4, fixed_abs, tag = 'smem constant byte address 0x4 - core index']
  #allocation1 [shape = 'u32[144,128]{1,0:T(1,128)}', space=vmem, size = 0x12000, scoped, tag = 'internal scratch']
  #allocation2 [shape = 'f32[64,128]{1,0:T(8,128)}', space=vmem, size = 0x8000, scoped, tag = 'scratch operand']
  #allocation3 [shape = 'f32[64,128]{1,0:T(8,128)}', space=vmem, size = 0x8000, scoped, tag = 'scratch operand']
  %s0 = inlined_call_operand.vmem [shape: s32[64], index: 0, kind: input, shape index: {}]
  %s1 = inlined_call_operand.hbm [shape: f32[56,128], index: 1, kind: input, shape index: {}]
  %s2 = inlined_call_operand.hbm [shape: f32[128,128], index: 2, kind: input, shape index: {}]
  %s3 = inlined_call_operand.hbm [shape: f32[128,128], index: 3, kind: input, shape index: {}]
  %s4 = inlined_call_operand.vmem [shape: f32[1,128], index: 4, kind: input, shape index: {}]
  %s5 = inlined_call_operand.hbm [shape: f32[128,128], index: 5, kind: input, shape index: {}]
  %s6 = inlined_call_operand.vmem [shape: f32[1,128], index: 6, kind: input, shape index: {}]
  %s7 = inlined_call_operand.vmem [shape: f32[8,128], index: 7, kind: output, shape index: {}]
  %s8 = sld [smem:[#allocation0]]
  $region58: #{rnn_forward.1} parent=0
    _
  %s10 = ssub.s32 1, %s8
  %s11 = scalar_select 0, %s10, %s8
  $region1: #{rnn_forward.1} parent=0
    #allocation4 [shape = 'u8[512]{0}', space=smem, size = 0x200, scoped, tag = 'input window, operand 0, single buffered']
    #allocation5 [shape = 's32[1]{0}', space=sflag, size = 0x4, scoped, tag = 'scoped memory for rnn_forward.1']
    #allocation6 [shape = 's32[1]{0}', space=sflag, size = 0x4, scoped, tag = 'scoped memory for rnn_forward.1']
    #allocation7 [shape = 'u8[28672]{0}', space=vmem, size = 0x7000, scoped, tag = 'input window, operand 1, single buffered']
    #allocation8 [shape = 'u8[65536]{0}', space=vmem, size = 0x10000, scoped, tag = 'input window, operand 2, single buffered']
    #allocation9 [shape = 's32[1]{0}', space=sflag, size = 0x4, scoped, tag = 'scoped memory for rnn_forward.1']
    #allocation10 [shape = 'u8[65536]{0}', space=vmem, size = 0x10000, scoped, tag = 'input window, operand 3, single buffered']
    #allocation11 [shape = 'u8[65536]{0}', space=vmem, size = 0x10000, scoped, tag = 'input window, operand 5, single buffered']
    #allocation12 [shape = 's32[1]{0}', space=sflag, size = 0x4, scoped, tag = 'scoped memory for rnn_forward.1']
    %12 = vsyncpa [#allocation6], 0
    %13 = vsyncpa [#allocation5], 0
    %14 = vsyncpa [#allocation9], 0
    %15 = vsyncpa [#allocation12], 0
    // Predicated region
    $region2: #{rnn_forward.1} parent=1 // pred_check
      _
    $region3: #{rnn_forward.1} parent=1 // pred_check_branch
      %17 = sbr.rel (0) target = $region5
    $region4: #{rnn_forward.1} parent=1 // pred_region
      %s19 = ssub.s32 16, 16
      %20 = vsyncadd [#allocation6], %s19
      %s22 = sshll.u32 %s0, 4
      %s23 = int_to_ptr.vmem [resolvable:$true] %s22
      %25 = dma.vmem_to_smem %s23, 16, [#allocation4], [#allocation6]
    $region5: #{rnn_forward.1} parent=1 // pred_fallthru
      _
    // Predicated region
    $region6: #{rnn_forward.1} parent=1 // pred_check
      _
    $region7: #{rnn_forward.1} parent=1 // pred_check_branch
      %27 = sbr.rel (0) target = $region9
    $region8: #{rnn_forward.1} parent=1 // pred_region
      %s29 = ssub.s32 896, 896
      %30 = vsyncadd [#allocation5], %s29
      %s31 = sshll.u32 [#allocation7], 4
      %s32 = int_to_ptr.vmem [resolvable:$true] %s31
      %37 = dma.hbm_to_vmem [thread:$0]  %s1, 896, %s32, [#allocation5], 128, 128, 8
    $region9: #{rnn_forward.1} parent=1 // pred_fallthru
      _
    // Predicated region
    $region10: #{rnn_forward.1} parent=1 // pred_check
      _
    $region11: #{rnn_forward.1} parent=1 // pred_check_branch
      %39 = sbr.rel (0) target = $region13
    $region12: #{rnn_forward.1} parent=1 // pred_region
      %s41 = ssub.s32 2048, 2048
      %42 = vsyncadd [#allocation9], %s41
      %s43 = sshll.u32 [#allocation8], 4
      %s44 = int_to_ptr.vmem [resolvable:$true] %s43
      %49 = dma.hbm_to_vmem [thread:$0]  %s2, 2048, %s44, [#allocation9], 128, 128, 8
    $region13: #{rnn_forward.1} parent=1 // pred_fallthru
      _
    // Predicated region
    $region14: #{rnn_forward.1} parent=1 // pred_check
      _
    $region15: #{rnn_forward.1} parent=1 // pred_check_branch
      %51 = sbr.rel (0) target = $region17
    $region16: #{rnn_forward.1} parent=1 // pred_region
      %s53 = ssub.s32 2048, 2048
      %54 = vsyncadd [#allocation9], %s53
      %s55 = sshll.u32 [#allocation10], 4
      %s56 = int_to_ptr.vmem [resolvable:$true] %s55
      %61 = dma.hbm_to_vmem [thread:$0]  %s3, 2048, %s56, [#allocation9], 128, 128, 8
    $region17: #{rnn_forward.1} parent=1 // pred_fallthru
      _
    // Predicated region
    $region18: #{rnn_forward.1} parent=1 // pred_check
      _
    $region19: #{rnn_forward.1} parent=1 // pred_check_branch
      %63 = sbr.rel (0) target = $region21
    $region20: #{rnn_forward.1} parent=1 // pred_region
      _
    $region21: #{rnn_forward.1} parent=1 // pred_fallthru
      _
    // Predicated region
    $region22: #{rnn_forward.1} parent=1 // pred_check
      _
    $region23: #{rnn_forward.1} parent=1 // pred_check_branch
      %65 = sbr.rel (0) target = $region25
    $region24: #{rnn_forward.1} parent=1 // pred_region
      %s67 = ssub.s32 2048, 2048
      %68 = vsyncadd [#allocation12], %s67
      %s69 = sshll.u32 [#allocation11], 4
      %s70 = int_to_ptr.vmem [resolvable:$true] %s69
      %75 = dma.hbm_to_vmem [thread:$0]  %s5, 2048, %s70, [#allocation12], 128, 128, 8
    $region25: #{rnn_forward.1} parent=1 // pred_fallthru
      _
    // Predicated region
    $region26: #{rnn_forward.1} parent=1 // pred_check
      _
    $region27: #{rnn_forward.1} parent=1 // pred_check_branch
      %77 = sbr.rel (0) target = $region29
    $region28: #{rnn_forward.1} parent=1 // pred_region
      _
    $region29: #{rnn_forward.1} parent=1 // pred_fallthru
      _
    // Predicated region
    $region30: #{rnn_forward.1} parent=1 // pred_check
      _
    $region31: #{rnn_forward.1} parent=1 // pred_check_branch
      %79 = sbr.rel (0) target = $region33
    $region32: #{rnn_forward.1} parent=1 // pred_region
      %80 = dma.done [#allocation6], 16
    $region33: #{rnn_forward.1} parent=1 // pred_fallthru
      _
    // Predicated region
    $region34: #{rnn_forward.1} parent=1 // pred_check
      _
    $region35: #{rnn_forward.1} parent=1 // pred_check_branch
      %82 = sbr.rel (0) target = $region37
    $region36: #{rnn_forward.1} parent=1 // pred_region
      %83 = dma.done [#allocation5], 896
    $region37: #{rnn_forward.1} parent=1 // pred_fallthru
      _
    // Predicated region
    $region38: #{rnn_forward.1} parent=1 // pred_check
      _
    $region39: #{rnn_forward.1} parent=1 // pred_check_branch
      %85 = sbr.rel (0) target = $region41
    $region40: #{rnn_forward.1} parent=1 // pred_region
      %86 = dma.done [#allocation9], 2048
    $region41: #{rnn_forward.1} parent=1 // pred_fallthru
      _
    // Predicated region
    $region42: #{rnn_forward.1} parent=1 // pred_check
      _
    $region43: #{rnn_forward.1} parent=1 // pred_check_branch
      %88 = sbr.rel (0) target = $region45
    $region44: #{rnn_forward.1} parent=1 // pred_region
      %89 = dma.done [#allocation9], 2048
    $region45: #{rnn_forward.1} parent=1 // pred_fallthru
      _
    // Predicated region
    $region46: #{rnn_forward.1} parent=1 // pred_check
      _
    $region47: #{rnn_forward.1} parent=1 // pred_check_branch
      %91 = sbr.rel (0) target = $region49
    $region48: #{rnn_forward.1} parent=1 // pred_region
      %92 = dma.done [#allocation12], 2048
    $region49: #{rnn_forward.1} parent=1 // pred_fallthru
      _
    %93 = sfence
    %s94 = sld [smem:[#allocation4]]
    %s95 = scalar_lea.vmem [#allocation7], %s94
    %v96 = vld [vmem:[%s95] sm:$0x1]
    %s97 = sld [smem:[#allocation4 + $0x1]]
    %s98 = scalar_lea.vmem [#allocation7], %s97
    %v99 = vld [vmem:[%s98] sm:$0x1]
    %s100 = sld [smem:[#allocation4 + $0x2]]
    %s101 = scalar_lea.vmem [#allocation7], %s100
    %v102 = vld [vmem:[%s101] sm:$0x1]
    %s103 = sld [smem:[#allocation4 + $0x3]]
    %s104 = scalar_lea.vmem [#allocation7], %s103
    %v105 = vld [vmem:[%s104] sm:$0x1]
    %s106 = sld [smem:[#allocation4 + $0x4]]
    %s107 = scalar_lea.vmem [#allocation7], %s106
    %v108 = vld [vmem:[%s107] sm:$0x1]
    %s109 = sld [smem:[#allocation4 + $0x5]]
    %s110 = scalar_lea.vmem [#allocation7], %s109
    %v111 = vld [vmem:[%s110] sm:$0x1]
    %s112 = sld [smem:[#allocation4 + $0x6]]
    %s113 = scalar_lea.vmem [#allocation7], %s112
    %v114 = vld [vmem:[%s113] sm:$0x1]
    %s115 = sld [smem:[#allocation4 + $0x7]]
    %s116 = scalar_lea.vmem [#allocation7], %s115
    %v117 = vld [vmem:[%s116] sm:$0x1]
    %v119 = vrot.slane %v99, 7
    %v122 = vrot.slane %v102, 6
    %v125 = vrot.slane %v105, 5
    %v128 = vrot.slane %v108, 4
    %v131 = vrot.slane %v111, 3
    %v134 = vrot.slane %v114, 2
    %v137 = vrot.slane %v117, 1
    %vm139 = vcmask 1040384
    %v140 = vsel %vm139, %v96, %v119
    %vm141 = vcmask 1041408
    %v142 = vsel %vm141, %v140, %v122
    %vm143 = vcmask 1042432
    %v144 = vsel %vm143, %v142, %v125
    %vm145 = vcmask 1043456
    %v146 = vsel %vm145, %v144, %v128
    %vm147 = vcmask 1044480
    %v148 = vsel %vm147, %v146, %v131
    %vm149 = vcmask 1045504
    %v150 = vsel %vm149, %v148, %v134
    %vm151 = vcmask 1046528
    %v152 = vsel %vm151, %v150, %v137
    %153 = vst [vmem:[#allocation2] sm:$0xff] %v152
    %s154 = sld [smem:[#allocation4 + $0x8]]
    %s155 = scalar_lea.vmem [#allocation7], %s154
    %v156 = vld [vmem:[%s155] sm:$0x1]
    %s157 = sld [smem:[#allocation4 + $0x9]]
    %s158 = scalar_lea.vmem [#allocation7], %s157
    %v159 = vld [vmem:[%s158] sm:$0x1]
    %s160 = sld [smem:[#allocation4 + $0xa]]
    %s161 = scalar_lea.vmem [#allocation7], %s160
    %v162 = vld [vmem:[%s161] sm:$0x1]
    %s163 = sld [smem:[#allocation4 + $0xb]]
    %s164 = scalar_lea.vmem [#allocation7], %s163
    %v165 = vld [vmem:[%s164] sm:$0x1]
    %s166 = sld [smem:[#allocation4 + $0xc]]
    %s167 = scalar_lea.vmem [#allocation7], %s166
    %v168 = vld [vmem:[%s167] sm:$0x1]
    %s169 = sld [smem:[#allocation4 + $0xd]]
    %s170 = scalar_lea.vmem [#allocation7], %s169
    %v171 = vld [vmem:[%s170] sm:$0x1]
    %s172 = sld [smem:[#allocation4 + $0xe]]
    %s173 = scalar_lea.vmem [#allocation7], %s172
    %v174 = vld [vmem:[%s173] sm:$0x1]
    %s175 = sld [smem:[#allocation4 + $0xf]]
    %s176 = scalar_lea.vmem [#allocation7], %s175
    %v177 = vld [vmem:[%s176] sm:$0x1]
    %v179 = vrot.slane %v159, 7
    %v182 = vrot.slane %v162, 6
    %v185 = vrot.slane %v165, 5
    %v188 = vrot.slane %v168, 4
    %v191 = vrot.slane %v171, 3
    %v194 = vrot.slane %v174, 2
    %v197 = vrot.slane %v177, 1
    %v199 = vsel %vm139, %v156, %v179
    %v200 = vsel %vm141, %v199, %v182
    %v201 = vsel %vm143, %v200, %v185
    %v202 = vsel %vm145, %v201, %v188
    %v203 = vsel %vm147, %v202, %v191
    %v204 = vsel %vm149, %v203, %v194
    %v205 = vsel %vm151, %v204, %v197
    %s206 = scalar_lea.vmem [#allocation2], 8
    %207 = vst [vmem:[%s206] sm:$0xff] %v205
    %s208 = sld [smem:[#allocation4 + $0x10]]
    %s209 = scalar_lea.vmem [#allocation7], %s208
    %v210 = vld [vmem:[%s209] sm:$0x1]
    %s211 = sld [smem:[#allocation4 + $0x11]]
    %s212 = scalar_lea.vmem [#allocation7], %s211
    %v213 = vld [vmem:[%s212] sm:$0x1]
    %s214 = sld [smem:[#allocation4 + $0x12]]
    %s215 = scalar_lea.vmem [#allocation7], %s214
    %v216 = vld [vmem:[%s215] sm:$0x1]
    %s217 = sld [smem:[#allocation4 + $0x13]]
    %s218 = scalar_lea.vmem [#allocation7], %s217
    %v219 = vld [vmem:[%s218] sm:$0x1]
    %s220 = sld [smem:[#allocation4 + $0x14]]
    %s221 = scalar_lea.vmem [#allocation7], %s220
    %v222 = vld [vmem:[%s221] sm:$0x1]
    %s223 = sld [smem:[#allocation4 + $0x15]]
    %s224 = scalar_lea.vmem [#allocation7], %s223
    %v225 = vld [vmem:[%s224] sm:$0x1]
    %s226 = sld [smem:[#allocation4 + $0x16]]
    %s227 = scalar_lea.vmem [#allocation7], %s226
    %v228 = vld [vmem:[%s227] sm:$0x1]
    %s229 = sld [smem:[#allocation4 + $0x17]]
    %s230 = scalar_lea.vmem [#allocation7], %s229
    %v231 = vld [vmem:[%s230] sm:$0x1]
    %v233 = vrot.slane %v213, 7
    %v236 = vrot.slane %v216, 6
    %v239 = vrot.slane %v219, 5
    %v242 = vrot.slane %v222, 4
    %v245 = vrot.slane %v225, 3
    %v248 = vrot.slane %v228, 2
    %v251 = vrot.slane %v231, 1
    %v253 = vsel %vm139, %v210, %v233
    %v254 = vsel %vm141, %v253, %v236
    %v255 = vsel %vm143, %v254, %v239
    %v256 = vsel %vm145, %v255, %v242
    %v257 = vsel %vm147, %v256, %v245
    %v258 = vsel %vm149, %v257, %v248
    %v259 = vsel %vm151, %v258, %v251
    %s260 = scalar_lea.vmem [#allocation2], 16
    %261 = vst [vmem:[%s260] sm:$0xff] %v259
    %s262 = sld [smem:[#allocation4 + $0x18]]
    %s263 = scalar_lea.vmem [#allocation7], %s262
    %v264 = vld [vmem:[%s263] sm:$0x1]
    %s265 = sld [smem:[#allocation4 + $0x19]]
    %s266 = scalar_lea.vmem [#allocation7], %s265
    %v267 = vld [vmem:[%s266] sm:$0x1]
    %s268 = sld [smem:[#allocation4 + $0x1a]]
    %s269 = scalar_lea.vmem [#allocation7], %s268
    %v270 = vld [vmem:[%s269] sm:$0x1]
    %s271 = sld [smem:[#allocation4 + $0x1b]]
    %s272 = scalar_lea.vmem [#allocation7], %s271
    %v273 = vld [vmem:[%s272] sm:$0x1]
    %s274 = sld [smem:[#allocation4 + $0x1c]]
    %s275 = scalar_lea.vmem [#allocation7], %s274
    %v276 = vld [vmem:[%s275] sm:$0x1]
    %s277 = sld [smem:[#allocation4 + $0x1d]]
    %s278 = scalar_lea.vmem [#allocation7], %s277
    %v279 = vld [vmem:[%s278] sm:$0x1]
    %s280 = sld [smem:[#allocation4 + $0x1e]]
    %s281 = scalar_lea.vmem [#allocation7], %s280
    %v282 = vld [vmem:[%s281] sm:$0x1]
    %s283 = sld [smem:[#allocation4 + $0x1f]]
    %s284 = scalar_lea.vmem [#allocation7], %s283
    %v285 = vld [vmem:[%s284] sm:$0x1]
    %v287 = vrot.slane %v267, 7
    %v290 = vrot.slane %v270, 6
    %v293 = vrot.slane %v273, 5
    %v296 = vrot.slane %v276, 4
    %v299 = vrot.slane %v279, 3
    %v302 = vrot.slane %v282, 2
    %v305 = vrot.slane %v285, 1
    %v307 = vsel %vm139, %v264, %v287
    %v308 = vsel %vm141, %v307, %v290
    %v309 = vsel %vm143, %v308, %v293
    %v310 = vsel %vm145, %v309, %v296
    %v311 = vsel %vm147, %v310, %v299
    %v312 = vsel %vm149, %v311, %v302
    %v313 = vsel %vm151, %v312, %v305
    %s314 = scalar_lea.vmem [#allocation2], 24
    %315 = vst [vmem:[%s314] sm:$0xff] %v313
    %s316 = sld [smem:[#allocation4 + $0x20]]
    %s317 = scalar_lea.vmem [#allocation7], %s316
    %v318 = vld [vmem:[%s317] sm:$0x1]
    %s319 = sld [smem:[#allocation4 + $0x21]]
    %s320 = scalar_lea.vmem [#allocation7], %s319
    %v321 = vld [vmem:[%s320] sm:$0x1]
    %s322 = sld [smem:[#allocation4 + $0x22]]
    %s323 = scalar_lea.vmem [#allocation7], %s322
    %v324 = vld [vmem:[%s323] sm:$0x1]
    %s325 = sld [smem:[#allocation4 + $0x23]]
    %s326 = scalar_lea.vmem [#allocation7], %s325
    %v327 = vld [vmem:[%s326] sm:$0x1]
    %s328 = sld [smem:[#allocation4 + $0x24]]
    %s329 = scalar_lea.vmem [#allocation7], %s328
    %v330 = vld [vmem:[%s329] sm:$0x1]
    %s331 = sld [smem:[#allocation4 + $0x25]]
    %s332 = scalar_lea.vmem [#allocation7], %s331
    %v333 = vld [vmem:[%s332] sm:$0x1]
    %s334 = sld [smem:[#allocation4 + $0x26]]
    %s335 = scalar_lea.vmem [#allocation7], %s334
    %v336 = vld [vmem:[%s335] sm:$0x1]
    %s337 = sld [smem:[#allocation4 + $0x27]]
    %s338 = scalar_lea.vmem [#allocation7], %s337
    %v339 = vld [vmem:[%s338] sm:$0x1]
    %v341 = vrot.slane %v321, 7
    %v344 = vrot.slane %v324, 6
    %v347 = vrot.slane %v327, 5
    %v350 = vrot.slane %v330, 4
    %v353 = vrot.slane %v333, 3
    %v356 = vrot.slane %v336, 2
    %v359 = vrot.slane %v339, 1
    %v361 = vsel %vm139, %v318, %v341
    %v362 = vsel %vm141, %v361, %v344
    %v363 = vsel %vm143, %v362, %v347
    %v364 = vsel %vm145, %v363, %v350
    %v365 = vsel %vm147, %v364, %v353
    %v366 = vsel %vm149, %v365, %v356
    %v367 = vsel %vm151, %v366, %v359
    %s368 = scalar_lea.vmem [#allocation2], 32
    %369 = vst [vmem:[%s368] sm:$0xff] %v367
    %s370 = sld [smem:[#allocation4 + $0x28]]
    %s371 = scalar_lea.vmem [#allocation7], %s370
    %v372 = vld [vmem:[%s371] sm:$0x1]
    %s373 = sld [smem:[#allocation4 + $0x29]]
    %s374 = scalar_lea.vmem [#allocation7], %s373
    %v375 = vld [vmem:[%s374] sm:$0x1]
    %s376 = sld [smem:[#allocation4 + $0x2a]]
    %s377 = scalar_lea.vmem [#allocation7], %s376
    %v378 = vld [vmem:[%s377] sm:$0x1]
    %s379 = sld [smem:[#allocation4 + $0x2b]]
    %s380 = scalar_lea.vmem [#allocation7], %s379
    %v381 = vld [vmem:[%s380] sm:$0x1]
    %s382 = sld [smem:[#allocation4 + $0x2c]]
    %s383 = scalar_lea.vmem [#allocation7], %s382
    %v384 = vld [vmem:[%s383] sm:$0x1]
    %s385 = sld [smem:[#allocation4 + $0x2d]]
    %s386 = scalar_lea.vmem [#allocation7], %s385
    %v387 = vld [vmem:[%s386] sm:$0x1]
    %s388 = sld [smem:[#allocation4 + $0x2e]]
    %s389 = scalar_lea.vmem [#allocation7], %s388
    %v390 = vld [vmem:[%s389] sm:$0x1]
    %s391 = sld [smem:[#allocation4 + $0x2f]]
    %s392 = scalar_lea.vmem [#allocation7], %s391
    %v393 = vld [vmem:[%s392] sm:$0x1]
    %v395 = vrot.slane %v375, 7
    %v398 = vrot.slane %v378, 6
    %v401 = vrot.slane %v381, 5
    %v404 = vrot.slane %v384, 4
    %v407 = vrot.slane %v387, 3
    %v410 = vrot.slane %v390, 2
    %v413 = vrot.slane %v393, 1
    %v415 = vsel %vm139, %v372, %v395
    %v416 = vsel %vm141, %v415, %v398
    %v417 = vsel %vm143, %v416, %v401
    %v418 = vsel %vm145, %v417, %v404
    %v419 = vsel %vm147, %v418, %v407
    %v420 = vsel %vm149, %v419, %v410
    %v421 = vsel %vm151, %v420, %v413
    %s422 = scalar_lea.vmem [#allocation2], 40
    %423 = vst [vmem:[%s422] sm:$0xff] %v421
    %s424 = sld [smem:[#allocation4 + $0x30]]
    %s425 = scalar_lea.vmem [#allocation7], %s424
    %v426 = vld [vmem:[%s425] sm:$0x1]
    %s427 = sld [smem:[#allocation4 + $0x31]]
    %s428 = scalar_lea.vmem [#allocation7], %s427
    %v429 = vld [vmem:[%s428] sm:$0x1]
    %s430 = sld [smem:[#allocation4 + $0x32]]
    %s431 = scalar_lea.vmem [#allocation7], %s430
    %v432 = vld [vmem:[%s431] sm:$0x1]
    %s433 = sld [smem:[#allocation4 + $0x33]]
    %s434 = scalar_lea.vmem [#allocation7], %s433
    %v435 = vld [vmem:[%s434] sm:$0x1]
    %s436 = sld [smem:[#allocation4 + $0x34]]
    %s437 = scalar_lea.vmem [#allocation7], %s436
    %v438 = vld [vmem:[%s437] sm:$0x1]
    %s439 = sld [smem:[#allocation4 + $0x35]]
    %s440 = scalar_lea.vmem [#allocation7], %s439
    %v441 = vld [vmem:[%s440] sm:$0x1]
    %s442 = sld [smem:[#allocation4 + $0x36]]
    %s443 = scalar_lea.vmem [#allocation7], %s442
    %v444 = vld [vmem:[%s443] sm:$0x1]
    %s445 = sld [smem:[#allocation4 + $0x37]]
    %s446 = scalar_lea.vmem [#allocation7], %s445
    %v447 = vld [vmem:[%s446] sm:$0x1]
    %v449 = vrot.slane %v429, 7
    %v452 = vrot.slane %v432, 6
    %v455 = vrot.slane %v435, 5
    %v458 = vrot.slane %v438, 4
    %v461 = vrot.slane %v441, 3
    %v464 = vrot.slane %v444, 2
    %v467 = vrot.slane %v447, 1
    %v469 = vsel %vm139, %v426, %v449
    %v470 = vsel %vm141, %v469, %v452
    %v471 = vsel %vm143, %v470, %v455
    %v472 = vsel %vm145, %v471, %v458
    %v473 = vsel %vm147, %v472, %v461
    %v474 = vsel %vm149, %v473, %v464
    %v475 = vsel %vm151, %v474, %v467
    %s476 = scalar_lea.vmem [#allocation2], 48
    %477 = vst [vmem:[%s476] sm:$0xff] %v475
    %s478 = sld [smem:[#allocation4 + $0x38]]
    %s479 = scalar_lea.vmem [#allocation7], %s478
    %v480 = vld [vmem:[%s479] sm:$0x1]
    %s481 = sld [smem:[#allocation4 + $0x39]]
    %s482 = scalar_lea.vmem [#allocation7], %s481
    %v483 = vld [vmem:[%s482] sm:$0x1]
    %s484 = sld [smem:[#allocation4 + $0x3a]]
    %s485 = scalar_lea.vmem [#allocation7], %s484
    %v486 = vld [vmem:[%s485] sm:$0x1]
    %s487 = sld [smem:[#allocation4 + $0x3b]]
    %s488 = scalar_lea.vmem [#allocation7], %s487
    %v489 = vld [vmem:[%s488] sm:$0x1]
    %s490 = sld [smem:[#allocation4 + $0x3c]]
    %s491 = scalar_lea.vmem [#allocation7], %s490
    %v492 = vld [vmem:[%s491] sm:$0x1]
    %s493 = sld [smem:[#allocation4 + $0x3d]]
    %s494 = scalar_lea.vmem [#allocation7], %s493
    %v495 = vld [vmem:[%s494] sm:$0x1]
    %s496 = sld [smem:[#allocation4 + $0x3e]]
    %s497 = scalar_lea.vmem [#allocation7], %s496
    %v498 = vld [vmem:[%s497] sm:$0x1]
    %s499 = sld [smem:[#allocation4 + $0x3f]]
    %s500 = scalar_lea.vmem [#allocation7], %s499
    %v501 = vld [vmem:[%s500] sm:$0x1]
    %v503 = vrot.slane %v483, 7
    %v506 = vrot.slane %v486, 6
    %v509 = vrot.slane %v489, 5
    %v512 = vrot.slane %v492, 4
    %v515 = vrot.slane %v495, 3
    %v518 = vrot.slane %v498, 2
    %v521 = vrot.slane %v501, 1
    %v523 = vsel %vm139, %v480, %v503
    %v524 = vsel %vm141, %v523, %v506
    %v525 = vsel %vm143, %v524, %v509
    %v526 = vsel %vm145, %v525, %v512
    %v527 = vsel %vm147, %v526, %v515
    %v528 = vsel %vm149, %v527, %v518
    %v529 = vsel %vm151, %v528, %v521
    %s530 = scalar_lea.vmem [#allocation2], 56
    %531 = vst [vmem:[%s530] sm:$0xff] %v529
    %v532 = vld [vmem:[#allocation2] sm:$0xff]
    %v533 = vld [vmem:[#allocation2 + $0x8] sm:$0xff]
    %v534 = vld [vmem:[#allocation2 + $0x10] sm:$0xff]
    %v535 = vld [vmem:[#allocation2 + $0x18] sm:$0xff]
    %v536 = vld [vmem:[#allocation2 + $0x20] sm:$0xff]
    %v537 = vld [vmem:[#allocation2 + $0x28] sm:$0xff]
    %v538 = vld [vmem:[#allocation2 + $0x30] sm:$0xff]
    %v539 = vld [vmem:[#allocation2 + $0x38] sm:$0xff]
    %v540 = vld [vmem:[#allocation8] sm:$0xff]
    %v541 = vld [vmem:[#allocation8 + $0x8] sm:$0xff]
    %v542 = vld [vmem:[#allocation8 + $0x10] sm:$0xff]
    %v543 = vld [vmem:[#allocation8 + $0x18] sm:$0xff]
    %v544 = vld [vmem:[#allocation8 + $0x20] sm:$0xff]
    %v545 = vld [vmem:[#allocation8 + $0x28] sm:$0xff]
    %v546 = vld [vmem:[#allocation8 + $0x30] sm:$0xff]
    %v547 = vld [vmem:[#allocation8 + $0x38] sm:$0xff]
    %v548 = vld [vmem:[#allocation8 + $0x40] sm:$0xff]
    %v549 = vld [vmem:[#allocation8 + $0x48] sm:$0xff]
    %v550 = vld [vmem:[#allocation8 + $0x50] sm:$0xff]
    %v551 = vld [vmem:[#allocation8 + $0x58] sm:$0xff]
    %v552 = vld [vmem:[#allocation8 + $0x60] sm:$0xff]
    %v553 = vld [vmem:[#allocation8 + $0x68] sm:$0xff]
    %v554 = vld [vmem:[#allocation8 + $0x70] sm:$0xff]
    %v555 = vld [vmem:[#allocation8 + $0x78] sm:$0xff]
    %v556 = vld [vmem:[%s4] sm:$0x1]
    %v558 = vlaneseq
    %v559 = vshrl.u32 %v558, 7
    %v560 = vsub.s32 0, %v559
    %v561 = vrot.slane %v556, %v560
    %563 = vmatprep.subr.mxu0 0.0
    %564 = vmatpush1.msra.mxu0 %v540
    %565 = vmatprep.subr.mxu0 0.0
    %566 = vmatpush1.msra.mxu0 %v541
    %567 = vmatprep.subr.mxu0 0.0
    %568 = vmatpush1.msra.mxu0 %v542
    %569 = vmatprep.subr.mxu0 0.0
    %570 = vmatpush1.msra.mxu0 %v543
    %571 = vmatprep.subr.mxu0 0.0
    %572 = vmatpush1.msra.mxu0 %v544
    %573 = vmatprep.subr.mxu0 0.0
    %574 = vmatpush1.msra.mxu0 %v545
    %575 = vmatprep.subr.mxu0 0.0
    %576 = vmatpush1.msra.mxu0 %v546
    %577 = vmatprep.subr.mxu0 0.0
    %578 = vmatpush1.msra.mxu0 %v547
    %579 = vmatprep.subr.mxu0 0.0
    %580 = vmatpush1.msra.mxu0 %v548
    %581 = vmatprep.subr.mxu0 0.0
    %582 = vmatpush1.msra.mxu0 %v549
    %583 = vmatprep.subr.mxu0 0.0
    %584 = vmatpush1.msra.mxu0 %v550
    %585 = vmatprep.subr.mxu0 0.0
    %586 = vmatpush1.msra.mxu0 %v551
    %587 = vmatprep.subr.mxu0 0.0
    %588 = vmatpush1.msra.mxu0 %v552
    %589 = vmatprep.subr.mxu0 0.0
    %590 = vmatpush1.msra.mxu0 %v553
    %591 = vmatprep.subr.mxu0 0.0
    %592 = vmatpush1.msra.mxu0 %v554
    %593 = vmatprep.subr.mxu0 0.0
    %594 = vmatpush1.msra.mxu0 %v555
    %595 = vmatprep.subr.mxu0 0.0
    %596 = vmatpush1.msra.mxu0 0.0
    %597 = vmatprep.subr.mxu0 0.0
    %598 = vmatpush1.msra.mxu0 0.0
    %599 = vmatprep.subr.mxu0 0.0
    %600 = vmatpush1.msra.mxu0 0.0
    %601 = vmatprep.subr.mxu0 0.0
    %602 = vmatpush1.msra.mxu0 0.0
    %603 = vmatprep.subr.mxu0 0.0
    %604 = vmatpush1.msra.mxu0 0.0
    %605 = vmatprep.subr.mxu0 0.0
    %606 = vmatpush1.msra.mxu0 0.0
    %607 = vmatprep.subr.mxu0 0.0
    %608 = vmatpush1.msra.mxu0 0.0
    %609 = vmatprep.subr.mxu0 0.0
    %610 = vmatpush1.msra.mxu0 0.0
    %611 = vmatprep.subr.mxu0 0.0
    %612 = vmatpush1.msra.mxu0 0.0
    %613 = vmatprep.subr.mxu0 0.0
    %614 = vmatpush1.msra.mxu0 0.0
    %615 = vmatprep.subr.mxu0 0.0
    %616 = vmatpush1.msra.mxu0 0.0
    %617 = vmatprep.subr.mxu0 0.0
    %618 = vmatpush1.msra.mxu0 0.0
    %619 = vmatprep.subr.mxu0 0.0
    %620 = vmatpush1.msra.mxu0 0.0
    %621 = vmatprep.subr.mxu0 0.0
    %622 = vmatpush1.msra.mxu0 0.0
    %623 = vmatprep.subr.mxu0 0.0
    %624 = vmatpush1.msra.mxu0 0.0
    %625 = vmatprep.subr.mxu0 0.0
    %626 = vmatpush1.msra.mxu0 0.0
    %627 = vmatprep.mubr.f32.mxu0 0.0
    %628 = vmatmul.mubr.f32.gmra.mrb[0].mxu0 %v532
    %v629 = vpop.f32.mrb[0].mxu0
    %v630 = vadd.f32 %v561, %v629
    %v631 = vpop.f32.mrb[0].mxu0
    %632 = vmatprep.mubr.f32.mxu0 0.0
    %633 = vmatmul.mubr.f32.gmra.mrb[0].mxu0 %v533
    %v634 = vpop.f32.mrb[0].mxu0
    %v635 = vadd.f32 %v561, %v634
    %v636 = vpop.f32.mrb[0].mxu0
    %637 = vmatprep.mubr.f32.mxu0 0.0
    %638 = vmatmul.mubr.f32.gmra.mrb[0].mxu0 %v534
    %v639 = vpop.f32.mrb[0].mxu0
    %v640 = vadd.f32 %v561, %v639
    %v641 = vpop.f32.mrb[0].mxu0
    %642 = vmatprep.mubr.f32.mxu0 0.0
    %643 = vmatmul.mubr.f32.gmra.mrb[0].mxu0 %v535
    %v644 = vpop.f32.mrb[0].mxu0
    %v645 = vadd.f32 %v561, %v644
    %v646 = vpop.f32.mrb[0].mxu0
    %647 = vmatprep.mubr.f32.mxu0 0.0
    %648 = vmatmul.mubr.f32.gmra.mrb[0].mxu0 %v536
    %v649 = vpop.f32.mrb[0].mxu0
    %v650 = vadd.f32 %v561, %v649
    %v651 = vpop.f32.mrb[0].mxu0
    %652 = vmatprep.mubr.f32.mxu0 0.0
    %653 = vmatmul.mubr.f32.gmra.mrb[0].mxu0 %v537
    %v654 = vpop.f32.mrb[0].mxu0
    %v655 = vadd.f32 %v561, %v654
    %v656 = vpop.f32.mrb[0].mxu0
    %657 = vmatprep.mubr.f32.mxu0 0.0
    %658 = vmatmul.mubr.f32.gmra.mrb[0].mxu0 %v538
    %v659 = vpop.f32.mrb[0].mxu0
    %v660 = vadd.f32 %v561, %v659
    %v661 = vpop.f32.mrb[0].mxu0
    %662 = vmatprep.mubr.f32.mxu0 0.0
    %663 = vmatmul.mubr.f32.gmra.mrb[0].mxu0 %v539
    %v664 = vpop.f32.mrb[0].mxu0
    %v665 = vadd.f32 %v561, %v664
    %v666 = vpop.f32.mrb[0].mxu0
    %667 = vdwg.mxu0
    %668 = vst [vmem:[#allocation3] sm:$0xff] %v630
    %669 = vst [vmem:[#allocation3 + $0x8] sm:$0xff] %v635
    %670 = vst [vmem:[#allocation3 + $0x10] sm:$0xff] %v640
    %671 = vst [vmem:[#allocation3 + $0x18] sm:$0xff] %v645
    %672 = vst [vmem:[#allocation3 + $0x20] sm:$0xff] %v650
    %673 = vst [vmem:[#allocation3 + $0x28] sm:$0xff] %v655
    %674 = vst [vmem:[#allocation3 + $0x30] sm:$0xff] %v660
    %675 = vst [vmem:[#allocation3 + $0x38] sm:$0xff] %v665
    %v676 = vld [vmem:[#allocation10] sm:$0xff]
    %v677 = vld [vmem:[#allocation10 + $0x8] sm:$0xff]
    %v678 = vld [vmem:[#allocation10 + $0x10] sm:$0xff]
    %v679 = vld [vmem:[#allocation10 + $0x18] sm:$0xff]
    %v680 = vld [vmem:[#allocation10 + $0x20] sm:$0xff]
    %v681 = vld [vmem:[#allocation10 + $0x28] sm:$0xff]
    %v682 = vld [vmem:[#allocation10 + $0x30] sm:$0xff]
    %v683 = vld [vmem:[#allocation10 + $0x38] sm:$0xff]
    %v684 = vld [vmem:[#allocation10 + $0x40] sm:$0xff]
    %v685 = vld [vmem:[#allocation10 + $0x48] sm:$0xff]
    %v686 = vld [vmem:[#allocation10 + $0x50] sm:$0xff]
    %v687 = vld [vmem:[#allocation10 + $0x58] sm:$0xff]
    %v688 = vld [vmem:[#allocation10 + $0x60] sm:$0xff]
    %v689 = vld [vmem:[#allocation10 + $0x68] sm:$0xff]
    %v690 = vld [vmem:[#allocation10 + $0x70] sm:$0xff]
    %v691 = vld [vmem:[#allocation10 + $0x78] sm:$0xff]
    %v692 = vld [vmem:[#allocation3] sm:$0xff]
    %693 = vmatprep.subr.mxu0 0.0
    %694 = vmatpush1.msra.mxu0 %v676
    %695 = vmatprep.subr.mxu0 0.0
    %696 = vmatpush1.msra.mxu0 %v677
    %697 = vmatprep.subr.mxu0 0.0
    %698 = vmatpush1.msra.mxu0 %v678
    %699 = vmatprep.subr.mxu0 0.0
    %700 = vmatpush1.msra.mxu0 %v679
    %701 = vmatprep.subr.mxu0 0.0
    %702 = vmatpush1.msra.mxu0 %v680
    %703 = vmatprep.subr.mxu0 0.0
    %704 = vmatpush1.msra.mxu0 %v681
    %705 = vmatprep.subr.mxu0 0.0
    %706 = vmatpush1.msra.mxu0 %v682
    %707 = vmatprep.subr.mxu0 0.0
    %708 = vmatpush1.msra.mxu0 %v683
    %709 = vmatprep.subr.mxu0 0.0
    %710 = vmatpush1.msra.mxu0 %v684
    %711 = vmatprep.subr.mxu0 0.0
    %712 = vmatpush1.msra.mxu0 %v685
    %713 = vmatprep.subr.mxu0 0.0
    %714 = vmatpush1.msra.mxu0 %v686
    %715 = vmatprep.subr.mxu0 0.0
    %716 = vmatpush1.msra.mxu0 %v687
    %717 = vmatprep.subr.mxu0 0.0
    %718 = vmatpush1.msra.mxu0 %v688
    %719 = vmatprep.subr.mxu0 0.0
    %720 = vmatpush1.msra.mxu0 %v689
    %721 = vmatprep.subr.mxu0 0.0
    %722 = vmatpush1.msra.mxu0 %v690
    %723 = vmatprep.subr.mxu0 0.0
    %724 = vmatpush1.msra.mxu0 %v691
    %725 = vmatprep.subr.mxu0 0.0
    %726 = vmatpush1.msra.mxu0 0.0
    %727 = vmatprep.subr.mxu0 0.0
    %728 = vmatpush1.msra.mxu0 0.0
    %729 = vmatprep.subr.mxu0 0.0
    %730 = vmatpush1.msra.mxu0 0.0
    %731 = vmatprep.subr.mxu0 0.0
    %732 = vmatpush1.msra.mxu0 0.0
    %733 = vmatprep.subr.mxu0 0.0
    %734 = vmatpush1.msra.mxu0 0.0
    %735 = vmatprep.subr.mxu0 0.0
    %736 = vmatpush1.msra.mxu0 0.0
    %737 = vmatprep.subr.mxu0 0.0
    %738 = vmatpush1.msra.mxu0 0.0
    %739 = vmatprep.subr.mxu0 0.0
    %740 = vmatpush1.msra.mxu0 0.0
    %741 = vmatprep.subr.mxu0 0.0
    %742 = vmatpush1.msra.mxu0 0.0
    %743 = vmatprep.subr.mxu0 0.0
    %744 = vmatpush1.msra.mxu0 0.0
    %745 = vmatprep.subr.mxu0 0.0
    %746 = vmatpush1.msra.mxu0 0.0
    %747 = vmatprep.subr.mxu0 0.0
    %748 = vmatpush1.msra.mxu0 0.0
    %749 = vmatprep.subr.mxu0 0.0
    %750 = vmatpush1.msra.mxu0 0.0
    %751 = vmatprep.subr.mxu0 0.0
    %752 = vmatpush1.msra.mxu0 0.0
    %753 = vmatprep.subr.mxu0 0.0
    %754 = vmatpush1.msra.mxu0 0.0
    %755 = vmatprep.subr.mxu0 0.0
    %756 = vmatpush1.msra.mxu0 0.0
    %757 = vmatprep.mubr.f32.mxu0 0.0
    %758 = vmatmul.mubr.f32.gmra.mrb[0].mxu0 0.0
    %v759 = vpop.f32.mrb[0].mxu0
    %v760 = vadd.f32 0.0, %v759
    %v761 = vpop.f32.mrb[0].mxu0
    %762 = vdwg.mxu0
    %v763 = vadd.f32 %v692, %v760
    %v764 = vtanh.pop %v763
    %s765 = scalar_lea.vmem [#allocation3], 8
    %v766 = vld [vmem:[%s765] sm:$0xff]
    %767 = vmatprep.subr.mxu0 0.0
    %768 = vmatpush1.msra.mxu0 %v676
    %769 = vmatprep.subr.mxu0 0.0
    %770 = vmatpush1.msra.mxu0 %v677
    %771 = vmatprep.subr.mxu0 0.0
    %772 = vmatpush1.msra.mxu0 %v678
    %773 = vmatprep.subr.mxu0 0.0
    %774 = vmatpush1.msra.mxu0 %v679
    %775 = vmatprep.subr.mxu0 0.0
    %776 = vmatpush1.msra.mxu0 %v680
    %777 = vmatprep.subr.mxu0 0.0
    %778 = vmatpush1.msra.mxu0 %v681
    %779 = vmatprep.subr.mxu0 0.0
    %780 = vmatpush1.msra.mxu0 %v682
    %781 = vmatprep.subr.mxu0 0.0
    %782 = vmatpush1.msra.mxu0 %v683
    %783 = vmatprep.subr.mxu0 0.0
    %784 = vmatpush1.msra.mxu0 %v684
    %785 = vmatprep.subr.mxu0 0.0
    %786 = vmatpush1.msra.mxu0 %v685
    %787 = vmatprep.subr.mxu0 0.0
    %788 = vmatpush1.msra.mxu0 %v686
    %789 = vmatprep.subr.mxu0 0.0
    %790 = vmatpush1.msra.mxu0 %v687
    %791 = vmatprep.subr.mxu0 0.0
    %792 = vmatpush1.msra.mxu0 %v688
    %793 = vmatprep.subr.mxu0 0.0
    %794 = vmatpush1.msra.mxu0 %v689
    %795 = vmatprep.subr.mxu0 0.0
    %796 = vmatpush1.msra.mxu0 %v690
    %797 = vmatprep.subr.mxu0 0.0
    %798 = vmatpush1.msra.mxu0 %v691
    %799 = vmatprep.subr.mxu0 0.0
    %800 = vmatpush1.msra.mxu0 0.0
    %801 = vmatprep.subr.mxu0 0.0
    %802 = vmatpush1.msra.mxu0 0.0
    %803 = vmatprep.subr.mxu0 0.0
    %804 = vmatpush1.msra.mxu0 0.0
    %805 = vmatprep.subr.mxu0 0.0
    %806 = vmatpush1.msra.mxu0 0.0
    %807 = vmatprep.subr.mxu0 0.0
    %808 = vmatpush1.msra.mxu0 0.0
    %809 = vmatprep.subr.mxu0 0.0
    %810 = vmatpush1.msra.mxu0 0.0
    %811 = vmatprep.subr.mxu0 0.0
    %812 = vmatpush1.msra.mxu0 0.0
    %813 = vmatprep.subr.mxu0 0.0
    %814 = vmatpush1.msra.mxu0 0.0
    %815 = vmatprep.subr.mxu0 0.0
    %816 = vmatpush1.msra.mxu0 0.0
    %817 = vmatprep.subr.mxu0 0.0
    %818 = vmatpush1.msra.mxu0 0.0
    %819 = vmatprep.subr.mxu0 0.0
    %820 = vmatpush1.msra.mxu0 0.0
    %821 = vmatprep.subr.mxu0 0.0
    %822 = vmatpush1.msra.mxu0 0.0
    %823 = vmatprep.subr.mxu0 0.0
    %824 = vmatpush1.msra.mxu0 0.0
    %825 = vmatprep.subr.mxu0 0.0
    %826 = vmatpush1.msra.mxu0 0.0
    %827 = vmatprep.subr.mxu0 0.0
    %828 = vmatpush1.msra.mxu0 0.0
    %829 = vmatprep.subr.mxu0 0.0
    %830 = vmatpush1.msra.mxu0 0.0
    %831 = vmatprep.mubr.f32.mxu0 0.0
    %832 = vmatmul.mubr.f32.gmra.mrb[0].mxu0 %v764
    %v833 = vpop.f32.mrb[0].mxu0
    %v834 = vadd.f32 0.0, %v833
    %v835 = vpop.f32.mrb[0].mxu0
    %836 = vdwg.mxu0
    %v837 = vadd.f32 %v766, %v834
    %v838 = vtanh.pop %v837
    %s839 = scalar_lea.vmem [#allocation3], 16
    %v840 = vld [vmem:[%s839] sm:$0xff]
    %841 = vmatprep.subr.mxu0 0.0
    %842 = vmatpush1.msra.mxu0 %v676
    %843 = vmatprep.subr.mxu0 0.0
    %844 = vmatpush1.msra.mxu0 %v677
    %845 = vmatprep.subr.mxu0 0.0
    %846 = vmatpush1.msra.mxu0 %v678
    %847 = vmatprep.subr.mxu0 0.0
    %848 = vmatpush1.msra.mxu0 %v679
    %849 = vmatprep.subr.mxu0 0.0
    %850 = vmatpush1.msra.mxu0 %v680
    %851 = vmatprep.subr.mxu0 0.0
    %852 = vmatpush1.msra.mxu0 %v681
    %853 = vmatprep.subr.mxu0 0.0
    %854 = vmatpush1.msra.mxu0 %v682
    %855 = vmatprep.subr.mxu0 0.0
    %856 = vmatpush1.msra.mxu0 %v683
    %857 = vmatprep.subr.mxu0 0.0
    %858 = vmatpush1.msra.mxu0 %v684
    %859 = vmatprep.subr.mxu0 0.0
    %860 = vmatpush1.msra.mxu0 %v685
    %861 = vmatprep.subr.mxu0 0.0
    %862 = vmatpush1.msra.mxu0 %v686
    %863 = vmatprep.subr.mxu0 0.0
    %864 = vmatpush1.msra.mxu0 %v687
    %865 = vmatprep.subr.mxu0 0.0
    %866 = vmatpush1.msra.mxu0 %v688
    %867 = vmatprep.subr.mxu0 0.0
    %868 = vmatpush1.msra.mxu0 %v689
    %869 = vmatprep.subr.mxu0 0.0
    %870 = vmatpush1.msra.mxu0 %v690
    %871 = vmatprep.subr.mxu0 0.0
    %872 = vmatpush1.msra.mxu0 %v691
    %873 = vmatprep.subr.mxu0 0.0
    %874 = vmatpush1.msra.mxu0 0.0
    %875 = vmatprep.subr.mxu0 0.0
    %876 = vmatpush1.msra.mxu0 0.0
    %877 = vmatprep.subr.mxu0 0.0
    %878 = vmatpush1.msra.mxu0 0.0
    %879 = vmatprep.subr.mxu0 0.0
    %880 = vmatpush1.msra.mxu0 0.0
    %881 = vmatprep.subr.mxu0 0.0
    %882 = vmatpush1.msra.mxu0 0.0
    %883 = vmatprep.subr.mxu0 0.0
    %884 = vmatpush1.msra.mxu0 0.0
    %885 = vmatprep.subr.mxu0 0.0
    %886 = vmatpush1.msra.mxu0 0.0
    %887 = vmatprep.subr.mxu0 0.0
    %888 = vmatpush1.msra.mxu0 0.0
    %889 = vmatprep.subr.mxu0 0.0
    %890 = vmatpush1.msra.mxu0 0.0
    %891 = vmatprep.subr.mxu0 0.0
    %892 = vmatpush1.msra.mxu0 0.0
    %893 = vmatprep.subr.mxu0 0.0
    %894 = vmatpush1.msra.mxu0 0.0
    %895 = vmatprep.subr.mxu0 0.0
    %896 = vmatpush1.msra.mxu0 0.0
    %897 = vmatprep.subr.mxu0 0.0
    %898 = vmatpush1.msra.mxu0 0.0
    %899 = vmatprep.subr.mxu0 0.0
    %900 = vmatpush1.msra.mxu0 0.0
    %901 = vmatprep.subr.mxu0 0.0
    %902 = vmatpush1.msra.mxu0 0.0
    %903 = vmatprep.subr.mxu0 0.0
    %904 = vmatpush1.msra.mxu0 0.0
    %905 = vmatprep.mubr.f32.mxu0 0.0
    %906 = vmatmul.mubr.f32.gmra.mrb[0].mxu0 %v838
    %v907 = vpop.f32.mrb[0].mxu0
    %v908 = vadd.f32 0.0, %v907
    %v909 = vpop.f32.mrb[0].mxu0
    %910 = vdwg.mxu0
    %v911 = vadd.f32 %v840, %v908
    %v912 = vtanh.pop %v911
    %s913 = scalar_lea.vmem [#allocation3], 24
    %v914 = vld [vmem:[%s913] sm:$0xff]
    %915 = vmatprep.subr.mxu0 0.0
    %916 = vmatpush1.msra.mxu0 %v676
    %917 = vmatprep.subr.mxu0 0.0
    %918 = vmatpush1.msra.mxu0 %v677
    %919 = vmatprep.subr.mxu0 0.0
    %920 = vmatpush1.msra.mxu0 %v678
    %921 = vmatprep.subr.mxu0 0.0
    %922 = vmatpush1.msra.mxu0 %v679
    %923 = vmatprep.subr.mxu0 0.0
    %924 = vmatpush1.msra.mxu0 %v680
    %925 = vmatprep.subr.mxu0 0.0
    %926 = vmatpush1.msra.mxu0 %v681
    %927 = vmatprep.subr.mxu0 0.0
    %928 = vmatpush1.msra.mxu0 %v682
    %929 = vmatprep.subr.mxu0 0.0
    %930 = vmatpush1.msra.mxu0 %v683
    %931 = vmatprep.subr.mxu0 0.0
    %932 = vmatpush1.msra.mxu0 %v684
    %933 = vmatprep.subr.mxu0 0.0
    %934 = vmatpush1.msra.mxu0 %v685
    %935 = vmatprep.subr.mxu0 0.0
    %936 = vmatpush1.msra.mxu0 %v686
    %937 = vmatprep.subr.mxu0 0.0
    %938 = vmatpush1.msra.mxu0 %v687
    %939 = vmatprep.subr.mxu0 0.0
    %940 = vmatpush1.msra.mxu0 %v688
    %941 = vmatprep.subr.mxu0 0.0
    %942 = vmatpush1.msra.mxu0 %v689
    %943 = vmatprep.subr.mxu0 0.0
    %944 = vmatpush1.msra.mxu0 %v690
    %945 = vmatprep.subr.mxu0 0.0
    %946 = vmatpush1.msra.mxu0 %v691
    %947 = vmatprep.subr.mxu0 0.0
    %948 = vmatpush1.msra.mxu0 0.0
    %949 = vmatprep.subr.mxu0 0.0
    %950 = vmatpush1.msra.mxu0 0.0
    %951 = vmatprep.subr.mxu0 0.0
    %952 = vmatpush1.msra.mxu0 0.0
    %953 = vmatprep.subr.mxu0 0.0
    %954 = vmatpush1.msra.mxu0 0.0
    %955 = vmatprep.subr.mxu0 0.0
    %956 = vmatpush1.msra.mxu0 0.0
    %957 = vmatprep.subr.mxu0 0.0
    %958 = vmatpush1.msra.mxu0 0.0
    %959 = vmatprep.subr.mxu0 0.0
    %960 = vmatpush1.msra.mxu0 0.0
    %961 = vmatprep.subr.mxu0 0.0
    %962 = vmatpush1.msra.mxu0 0.0
    %963 = vmatprep.subr.mxu0 0.0
    %964 = vmatpush1.msra.mxu0 0.0
    %965 = vmatprep.subr.mxu0 0.0
    %966 = vmatpush1.msra.mxu0 0.0
    %967 = vmatprep.subr.mxu0 0.0
    %968 = vmatpush1.msra.mxu0 0.0
    %969 = vmatprep.subr.mxu0 0.0
    %970 = vmatpush1.msra.mxu0 0.0
    %971 = vmatprep.subr.mxu0 0.0
    %972 = vmatpush1.msra.mxu0 0.0
    %973 = vmatprep.subr.mxu0 0.0
    %974 = vmatpush1.msra.mxu0 0.0
    %975 = vmatprep.subr.mxu0 0.0
    %976 = vmatpush1.msra.mxu0 0.0
    %977 = vmatprep.subr.mxu0 0.0
    %978 = vmatpush1.msra.mxu0 0.0
    %979 = vmatprep.mubr.f32.mxu0 0.0
    %980 = vmatmul.mubr.f32.gmra.mrb[0].mxu0 %v912
    %v981 = vpop.f32.mrb[0].mxu0
    %v982 = vadd.f32 0.0, %v981
    %v983 = vpop.f32.mrb[0].mxu0
    %984 = vdwg.mxu0
    %v985 = vadd.f32 %v914, %v982
    %v986 = vtanh.pop %v985
    %s987 = scalar_lea.vmem [#allocation3], 32
    %v988 = vld [vmem:[%s987] sm:$0xff]
    %989 = vmatprep.subr.mxu0 0.0
    %990 = vmatpush1.msra.mxu0 %v676
    %991 = vmatprep.subr.mxu0 0.0
    %992 = vmatpush1.msra.mxu0 %v677
    %993 = vmatprep.subr.mxu0 0.0
    %994 = vmatpush1.msra.mxu0 %v678
    %995 = vmatprep.subr.mxu0 0.0
    %996 = vmatpush1.msra.mxu0 %v679
    %997 = vmatprep.subr.mxu0 0.0
    %998 = vmatpush1.msra.mxu0 %v680
    %999 = vmatprep.subr.mxu0 0.0
    %1000 = vmatpush1.msra.mxu0 %v681
    %1001 = vmatprep.subr.mxu0 0.0
    %1002 = vmatpush1.msra.mxu0 %v682
    %1003 = vmatprep.subr.mxu0 0.0
    %1004 = vmatpush1.msra.mxu0 %v683
    %1005 = vmatprep.subr.mxu0 0.0
    %1006 = vmatpush1.msra.mxu0 %v684
    %1007 = vmatprep.subr.mxu0 0.0
    %1008 = vmatpush1.msra.mxu0 %v685
    %1009 = vmatprep.subr.mxu0 0.0
    %1010 = vmatpush1.msra.mxu0 %v686
    %1011 = vmatprep.subr.mxu0 0.0
    %1012 = vmatpush1.msra.mxu0 %v687
    %1013 = vmatprep.subr.mxu0 0.0
    %1014 = vmatpush1.msra.mxu0 %v688
    %1015 = vmatprep.subr.mxu0 0.0
    %1016 = vmatpush1.msra.mxu0 %v689
    %1017 = vmatprep.subr.mxu0 0.0
    %1018 = vmatpush1.msra.mxu0 %v690
    %1019 = vmatprep.subr.mxu0 0.0
    %1020 = vmatpush1.msra.mxu0 %v691
    %1021 = vmatprep.subr.mxu0 0.0
    %1022 = vmatpush1.msra.mxu0 0.0
    %1023 = vmatprep.subr.mxu0 0.0
    %1024 = vmatpush1.msra.mxu0 0.0
    %1025 = vmatprep.subr.mxu0 0.0
    %1026 = vmatpush1.msra.mxu0 0.0
    %1027 = vmatprep.subr.mxu0 0.0
    %1028 = vmatpush1.msra.mxu0 0.0
    %1029 = vmatprep.subr.mxu0 0.0
    %1030 = vmatpush1.msra.mxu0 0.0
    %1031 = vmatprep.subr.mxu0 0.0
    %1032 = vmatpush1.msra.mxu0 0.0
    %1033 = vmatprep.subr.mxu0 0.0
    %1034 = vmatpush1.msra.mxu0 0.0
    %1035 = vmatprep.subr.mxu0 0.0
    %1036 = vmatpush1.msra.mxu0 0.0
    %1037 = vmatprep.subr.mxu0 0.0
    %1038 = vmatpush1.msra.mxu0 0.0
    %1039 = vmatprep.subr.mxu0 0.0
    %1040 = vmatpush1.msra.mxu0 0.0
    %1041 = vmatprep.subr.mxu0 0.0
    %1042 = vmatpush1.msra.mxu0 0.0
    %1043 = vmatprep.subr.mxu0 0.0
    %1044 = vmatpush1.msra.mxu0 0.0
    %1045 = vmatprep.subr.mxu0 0.0
    %1046 = vmatpush1.msra.mxu0 0.0
    %1047 = vmatprep.subr.mxu0 0.0
    %1048 = vmatpush1.msra.mxu0 0.0
    %1049 = vmatprep.subr.mxu0 0.0
    %1050 = vmatpush1.msra.mxu0 0.0
    %1051 = vmatprep.subr.mxu0 0.0
    %1052 = vmatpush1.msra.mxu0 0.0
    %1053 = vmatprep.mubr.f32.mxu0 0.0
    %1054 = vmatmul.mubr.f32.gmra.mrb[0].mxu0 %v986
    %v1055 = vpop.f32.mrb[0].mxu0
    %v1056 = vadd.f32 0.0, %v1055
    %v1057 = vpop.f32.mrb[0].mxu0
    %1058 = vdwg.mxu0
    %v1059 = vadd.f32 %v988, %v1056
    %v1060 = vtanh.pop %v1059
    %s1061 = scalar_lea.vmem [#allocation3], 40
    %v1062 = vld [vmem:[%s1061] sm:$0xff]
    %1063 = vmatprep.subr.mxu0 0.0
    %1064 = vmatpush1.msra.mxu0 %v676
    %1065 = vmatprep.subr.mxu0 0.0
    %1066 = vmatpush1.msra.mxu0 %v677
    %1067 = vmatprep.subr.mxu0 0.0
    %1068 = vmatpush1.msra.mxu0 %v678
    %1069 = vmatprep.subr.mxu0 0.0
    %1070 = vmatpush1.msra.mxu0 %v679
    %1071 = vmatprep.subr.mxu0 0.0
    %1072 = vmatpush1.msra.mxu0 %v680
    %1073 = vmatprep.subr.mxu0 0.0
    %1074 = vmatpush1.msra.mxu0 %v681
    %1075 = vmatprep.subr.mxu0 0.0
    %1076 = vmatpush1.msra.mxu0 %v682
    %1077 = vmatprep.subr.mxu0 0.0
    %1078 = vmatpush1.msra.mxu0 %v683
    %1079 = vmatprep.subr.mxu0 0.0
    %1080 = vmatpush1.msra.mxu0 %v684
    %1081 = vmatprep.subr.mxu0 0.0
    %1082 = vmatpush1.msra.mxu0 %v685
    %1083 = vmatprep.subr.mxu0 0.0
    %1084 = vmatpush1.msra.mxu0 %v686
    %1085 = vmatprep.subr.mxu0 0.0
    %1086 = vmatpush1.msra.mxu0 %v687
    %1087 = vmatprep.subr.mxu0 0.0
    %1088 = vmatpush1.msra.mxu0 %v688
    %1089 = vmatprep.subr.mxu0 0.0
    %1090 = vmatpush1.msra.mxu0 %v689
    %1091 = vmatprep.subr.mxu0 0.0
    %1092 = vmatpush1.msra.mxu0 %v690
    %1093 = vmatprep.subr.mxu0 0.0
    %1094 = vmatpush1.msra.mxu0 %v691
    %1095 = vmatprep.subr.mxu0 0.0
    %1096 = vmatpush1.msra.mxu0 0.0
    %1097 = vmatprep.subr.mxu0 0.0
    %1098 = vmatpush1.msra.mxu0 0.0
    %1099 = vmatprep.subr.mxu0 0.0
    %1100 = vmatpush1.msra.mxu0 0.0
    %1101 = vmatprep.subr.mxu0 0.0
    %1102 = vmatpush1.msra.mxu0 0.0
    %1103 = vmatprep.subr.mxu0 0.0
    %1104 = vmatpush1.msra.mxu0 0.0
    %1105 = vmatprep.subr.mxu0 0.0
    %1106 = vmatpush1.msra.mxu0 0.0
    %1107 = vmatprep.subr.mxu0 0.0
    %1108 = vmatpush1.msra.mxu0 0.0
    %1109 = vmatprep.subr.mxu0 0.0
    %1110 = vmatpush1.msra.mxu0 0.0
    %1111 = vmatprep.subr.mxu0 0.0
    %1112 = vmatpush1.msra.mxu0 0.0
    %1113 = vmatprep.subr.mxu0 0.0
    %1114 = vmatpush1.msra.mxu0 0.0
    %1115 = vmatprep.subr.mxu0 0.0
    %1116 = vmatpush1.msra.mxu0 0.0
    %1117 = vmatprep.subr.mxu0 0.0
    %1118 = vmatpush1.msra.mxu0 0.0
    %1119 = vmatprep.subr.mxu0 0.0
    %1120 = vmatpush1.msra.mxu0 0.0
    %1121 = vmatprep.subr.mxu0 0.0
    %1122 = vmatpush1.msra.mxu0 0.0
    %1123 = vmatprep.subr.mxu0 0.0
    %1124 = vmatpush1.msra.mxu0 0.0
    %1125 = vmatprep.subr.mxu0 0.0
    %1126 = vmatpush1.msra.mxu0 0.0
    %1127 = vmatprep.mubr.f32.mxu0 0.0
    %1128 = vmatmul.mubr.f32.gmra.mrb[0].mxu0 %v1060
    %v1129 = vpop.f32.mrb[0].mxu0
    %v1130 = vadd.f32 0.0, %v1129
    %v1131 = vpop.f32.mrb[0].mxu0
    %1132 = vdwg.mxu0
    %v1133 = vadd.f32 %v1062, %v1130
    %v1134 = vtanh.pop %v1133
    %s1135 = scalar_lea.vmem [#allocation3], 48
    %v1136 = vld [vmem:[%s1135] sm:$0xff]
    %1137 = vmatprep.subr.mxu0 0.0
    %1138 = vmatpush1.msra.mxu0 %v676
    %1139 = vmatprep.subr.mxu0 0.0
    %1140 = vmatpush1.msra.mxu0 %v677
    %1141 = vmatprep.subr.mxu0 0.0
    %1142 = vmatpush1.msra.mxu0 %v678
    %1143 = vmatprep.subr.mxu0 0.0
    %1144 = vmatpush1.msra.mxu0 %v679
    %1145 = vmatprep.subr.mxu0 0.0
    %1146 = vmatpush1.msra.mxu0 %v680
    %1147 = vmatprep.subr.mxu0 0.0
    %1148 = vmatpush1.msra.mxu0 %v681
    %1149 = vmatprep.subr.mxu0 0.0
    %1150 = vmatpush1.msra.mxu0 %v682
    %1151 = vmatprep.subr.mxu0 0.0
    %1152 = vmatpush1.msra.mxu0 %v683
    %1153 = vmatprep.subr.mxu0 0.0
    %1154 = vmatpush1.msra.mxu0 %v684
    %1155 = vmatprep.subr.mxu0 0.0
    %1156 = vmatpush1.msra.mxu0 %v685
    %1157 = vmatprep.subr.mxu0 0.0
    %1158 = vmatpush1.msra.mxu0 %v686
    %1159 = vmatprep.subr.mxu0 0.0
    %1160 = vmatpush1.msra.mxu0 %v687
    %1161 = vmatprep.subr.mxu0 0.0
    %1162 = vmatpush1.msra.mxu0 %v688
    %1163 = vmatprep.subr.mxu0 0.0
    %1164 = vmatpush1.msra.mxu0 %v689
    %1165 = vmatprep.subr.mxu0 0.0
    %1166 = vmatpush1.msra.mxu0 %v690
    %1167 = vmatprep.subr.mxu0 0.0
    %1168 = vmatpush1.msra.mxu0 %v691
    %1169 = vmatprep.subr.mxu0 0.0
    %1170 = vmatpush1.msra.mxu0 0.0
    %1171 = vmatprep.subr.mxu0 0.0
    %1172 = vmatpush1.msra.mxu0 0.0
    %1173 = vmatprep.subr.mxu0 0.0
    %1174 = vmatpush1.msra.mxu0 0.0
    %1175 = vmatprep.subr.mxu0 0.0
    %1176 = vmatpush1.msra.mxu0 0.0
    %1177 = vmatprep.subr.mxu0 0.0
    %1178 = vmatpush1.msra.mxu0 0.0
    %1179 = vmatprep.subr.mxu0 0.0
    %1180 = vmatpush1.msra.mxu0 0.0
    %1181 = vmatprep.subr.mxu0 0.0
    %1182 = vmatpush1.msra.mxu0 0.0
    %1183 = vmatprep.subr.mxu0 0.0
    %1184 = vmatpush1.msra.mxu0 0.0
    %1185 = vmatprep.subr.mxu0 0.0
    %1186 = vmatpush1.msra.mxu0 0.0
    %1187 = vmatprep.subr.mxu0 0.0
    %1188 = vmatpush1.msra.mxu0 0.0
    %1189 = vmatprep.subr.mxu0 0.0
    %1190 = vmatpush1.msra.mxu0 0.0
    %1191 = vmatprep.subr.mxu0 0.0
    %1192 = vmatpush1.msra.mxu0 0.0
    %1193 = vmatprep.subr.mxu0 0.0
    %1194 = vmatpush1.msra.mxu0 0.0
    %1195 = vmatprep.subr.mxu0 0.0
    %1196 = vmatpush1.msra.mxu0 0.0
    %1197 = vmatprep.subr.mxu0 0.0
    %1198 = vmatpush1.msra.mxu0 0.0
    %1199 = vmatprep.subr.mxu0 0.0
    %1200 = vmatpush1.msra.mxu0 0.0
    %1201 = vmatprep.mubr.f32.mxu0 0.0
    %1202 = vmatmul.mubr.f32.gmra.mrb[0].mxu0 %v1134
    %v1203 = vpop.f32.mrb[0].mxu0
    %v1204 = vadd.f32 0.0, %v1203
    %v1205 = vpop.f32.mrb[0].mxu0
    %1206 = vdwg.mxu0
    %v1207 = vadd.f32 %v1136, %v1204
    %v1208 = vtanh.pop %v1207
    %s1209 = scalar_lea.vmem [#allocation3], 56
    %v1210 = vld [vmem:[%s1209] sm:$0xff]
    %1211 = vmatprep.subr.mxu0 0.0
    %1212 = vmatpush1.msra.mxu0 %v676
    %1213 = vmatprep.subr.mxu0 0.0
    %1214 = vmatpush1.msra.mxu0 %v677
    %1215 = vmatprep.subr.mxu0 0.0
    %1216 = vmatpush1.msra.mxu0 %v678
    %1217 = vmatprep.subr.mxu0 0.0
    %1218 = vmatpush1.msra.mxu0 %v679
    %1219 = vmatprep.subr.mxu0 0.0
    %1220 = vmatpush1.msra.mxu0 %v680
    %1221 = vmatprep.subr.mxu0 0.0
    %1222 = vmatpush1.msra.mxu0 %v681
    %1223 = vmatprep.subr.mxu0 0.0
    %1224 = vmatpush1.msra.mxu0 %v682
    %1225 = vmatprep.subr.mxu0 0.0
    %1226 = vmatpush1.msra.mxu0 %v683
    %1227 = vmatprep.subr.mxu0 0.0
    %1228 = vmatpush1.msra.mxu0 %v684
    %1229 = vmatprep.subr.mxu0 0.0
    %1230 = vmatpush1.msra.mxu0 %v685
    %1231 = vmatprep.subr.mxu0 0.0
    %1232 = vmatpush1.msra.mxu0 %v686
    %1233 = vmatprep.subr.mxu0 0.0
    %1234 = vmatpush1.msra.mxu0 %v687
    %1235 = vmatprep.subr.mxu0 0.0
    %1236 = vmatpush1.msra.mxu0 %v688
    %1237 = vmatprep.subr.mxu0 0.0
    %1238 = vmatpush1.msra.mxu0 %v689
    %1239 = vmatprep.subr.mxu0 0.0
    %1240 = vmatpush1.msra.mxu0 %v690
    %1241 = vmatprep.subr.mxu0 0.0
    %1242 = vmatpush1.msra.mxu0 %v691
    %1243 = vmatprep.subr.mxu0 0.0
    %1244 = vmatpush1.msra.mxu0 0.0
    %1245 = vmatprep.subr.mxu0 0.0
    %1246 = vmatpush1.msra.mxu0 0.0
    %1247 = vmatprep.subr.mxu0 0.0
    %1248 = vmatpush1.msra.mxu0 0.0
    %1249 = vmatprep.subr.mxu0 0.0
    %1250 = vmatpush1.msra.mxu0 0.0
    %1251 = vmatprep.subr.mxu0 0.0
    %1252 = vmatpush1.msra.mxu0 0.0
    %1253 = vmatprep.subr.mxu0 0.0
    %1254 = vmatpush1.msra.mxu0 0.0
    %1255 = vmatprep.subr.mxu0 0.0
    %1256 = vmatpush1.msra.mxu0 0.0
    %1257 = vmatprep.subr.mxu0 0.0
    %1258 = vmatpush1.msra.mxu0 0.0
    %1259 = vmatprep.subr.mxu0 0.0
    %1260 = vmatpush1.msra.mxu0 0.0
    %1261 = vmatprep.subr.mxu0 0.0
    %1262 = vmatpush1.msra.mxu0 0.0
    %1263 = vmatprep.subr.mxu0 0.0
    %1264 = vmatpush1.msra.mxu0 0.0
    %1265 = vmatprep.subr.mxu0 0.0
    %1266 = vmatpush1.msra.mxu0 0.0
    %1267 = vmatprep.subr.mxu0 0.0
    %1268 = vmatpush1.msra.mxu0 0.0
    %1269 = vmatprep.subr.mxu0 0.0
    %1270 = vmatpush1.msra.mxu0 0.0
    %1271 = vmatprep.subr.mxu0 0.0
    %1272 = vmatpush1.msra.mxu0 0.0
    %1273 = vmatprep.subr.mxu0 0.0
    %1274 = vmatpush1.msra.mxu0 0.0
    %1275 = vmatprep.mubr.f32.mxu0 0.0
    %1276 = vmatmul.mubr.f32.gmra.mrb[0].mxu0 %v1208
    %v1277 = vpop.f32.mrb[0].mxu0
    %v1278 = vadd.f32 0.0, %v1277
    %v1279 = vpop.f32.mrb[0].mxu0
    %1280 = vdwg.mxu0
    %v1281 = vadd.f32 %v1210, %v1278
    %v1282 = vtanh.pop %v1281
    %v1283 = vld [vmem:[#allocation11] sm:$0xff]
    %v1284 = vld [vmem:[#allocation11 + $0x8] sm:$0xff]
    %v1285 = vld [vmem:[#allocation11 + $0x10] sm:$0xff]
    %v1286 = vld [vmem:[#allocation11 + $0x18] sm:$0xff]
    %v1287 = vld [vmem:[#allocation11 + $0x20] sm:$0xff]
    %v1288 = vld [vmem:[#allocation11 + $0x28] sm:$0xff]
    %v1289 = vld [vmem:[#allocation11 + $0x30] sm:$0xff]
    %v1290 = vld [vmem:[#allocation11 + $0x38] sm:$0xff]
    %v1291 = vld [vmem:[#allocation11 + $0x40] sm:$0xff]
    %v1292 = vld [vmem:[#allocation11 + $0x48] sm:$0xff]
    %v1293 = vld [vmem:[#allocation11 + $0x50] sm:$0xff]
    %v1294 = vld [vmem:[#allocation11 + $0x58] sm:$0xff]
    %v1295 = vld [vmem:[#allocation11 + $0x60] sm:$0xff]
    %v1296 = vld [vmem:[#allocation11 + $0x68] sm:$0xff]
    %v1297 = vld [vmem:[#allocation11 + $0x70] sm:$0xff]
    %v1298 = vld [vmem:[#allocation11 + $0x78] sm:$0xff]
    %v1299 = vld [vmem:[%s6] sm:$0x1]
    %v1301 = vlaneseq
    %v1302 = vshrl.u32 %v1301, 7
    %v1303 = vsub.s32 0, %v1302
    %v1304 = vrot.slane %v1299, %v1303
    %1306 = vmatprep.subr.mxu0 0.0
    %1307 = vmatpush1.msra.mxu0 %v1283
    %1308 = vmatprep.subr.mxu0 0.0
    %1309 = vmatpush1.msra.mxu0 %v1284
    %1310 = vmatprep.subr.mxu0 0.0
    %1311 = vmatpush1.msra.mxu0 %v1285
    %1312 = vmatprep.subr.mxu0 0.0
    %1313 = vmatpush1.msra.mxu0 %v1286
    %1314 = vmatprep.subr.mxu0 0.0
    %1315 = vmatpush1.msra.mxu0 %v1287
    %1316 = vmatprep.subr.mxu0 0.0
    %1317 = vmatpush1.msra.mxu0 %v1288
    %1318 = vmatprep.subr.mxu0 0.0
    %1319 = vmatpush1.msra.mxu0 %v1289
    %1320 = vmatprep.subr.mxu0 0.0
    %1321 = vmatpush1.msra.mxu0 %v1290
    %1322 = vmatprep.subr.mxu0 0.0
    %1323 = vmatpush1.msra.mxu0 %v1291
    %1324 = vmatprep.subr.mxu0 0.0
    %1325 = vmatpush1.msra.mxu0 %v1292
    %1326 = vmatprep.subr.mxu0 0.0
    %1327 = vmatpush1.msra.mxu0 %v1293
    %1328 = vmatprep.subr.mxu0 0.0
    %1329 = vmatpush1.msra.mxu0 %v1294
    %1330 = vmatprep.subr.mxu0 0.0
    %1331 = vmatpush1.msra.mxu0 %v1295
    %1332 = vmatprep.subr.mxu0 0.0
    %1333 = vmatpush1.msra.mxu0 %v1296
    %1334 = vmatprep.subr.mxu0 0.0
    %1335 = vmatpush1.msra.mxu0 %v1297
    %1336 = vmatprep.subr.mxu0 0.0
    %1337 = vmatpush1.msra.mxu0 %v1298
    %1338 = vmatprep.subr.mxu0 0.0
    %1339 = vmatpush1.msra.mxu0 0.0
    %1340 = vmatprep.subr.mxu0 0.0
    %1341 = vmatpush1.msra.mxu0 0.0
    %1342 = vmatprep.subr.mxu0 0.0
    %1343 = vmatpush1.msra.mxu0 0.0
    %1344 = vmatprep.subr.mxu0 0.0
    %1345 = vmatpush1.msra.mxu0 0.0
    %1346 = vmatprep.subr.mxu0 0.0
    %1347 = vmatpush1.msra.mxu0 0.0
    %1348 = vmatprep.subr.mxu0 0.0
    %1349 = vmatpush1.msra.mxu0 0.0
    %1350 = vmatprep.subr.mxu0 0.0
    %1351 = vmatpush1.msra.mxu0 0.0
    %1352 = vmatprep.subr.mxu0 0.0
    %1353 = vmatpush1.msra.mxu0 0.0
    %1354 = vmatprep.subr.mxu0 0.0
    %1355 = vmatpush1.msra.mxu0 0.0
    %1356 = vmatprep.subr.mxu0 0.0
    %1357 = vmatpush1.msra.mxu0 0.0
    %1358 = vmatprep.subr.mxu0 0.0
    %1359 = vmatpush1.msra.mxu0 0.0
    %1360 = vmatprep.subr.mxu0 0.0
    %1361 = vmatpush1.msra.mxu0 0.0
    %1362 = vmatprep.subr.mxu0 0.0
    %1363 = vmatpush1.msra.mxu0 0.0
    %1364 = vmatprep.subr.mxu0 0.0
    %1365 = vmatpush1.msra.mxu0 0.0
    %1366 = vmatprep.subr.mxu0 0.0
    %1367 = vmatpush1.msra.mxu0 0.0
    %1368 = vmatprep.subr.mxu0 0.0
    %1369 = vmatpush1.msra.mxu0 0.0
    %1370 = vmatprep.mubr.f32.mxu0 0.0
    %1371 = vmatmul.mubr.f32.gmra.mrb[0].mxu0 %v1282
    %v1372 = vpop.f32.mrb[0].mxu0
    %v1373 = vadd.f32 %v1304, %v1372
    %v1374 = vpop.f32.mrb[0].mxu0
    %1375 = vdwg.mxu0
    %1376 = vst [vmem:[%s7] sm:$0xff] %v1373
    // Predicated region
    $region50: #{rnn_forward.1} parent=1 // pred_check
      _
    $region51: #{rnn_forward.1} parent=1 // pred_check_branch
      %1378 = sbr.rel (0) target = $region53
    $region52: #{rnn_forward.1} parent=1 // pred_region
      _
    $region53: #{rnn_forward.1} parent=1 // pred_fallthru
      _
    // Predicated region
    $region54: #{rnn_forward.1} parent=1 // pred_check
      _
    $region55: #{rnn_forward.1} parent=1 // pred_check_branch
      %1380 = sbr.rel (0) target = $region57
    $region56: #{rnn_forward.1} parent=1 // pred_region
      _
    $region57: #{rnn_forward.1} parent=1 // pred_fallthru
      _
    %1381 = vsyncpa [#allocation5], 1
    %1382 = vsyncpa [#allocation9], 1
    %1383 = vsyncpa [#allocation12], 1
    %1384 = vsyncpa [#allocation6], 1

</llo_original>
